<compile_context>
chip_gen: v6e
topology: v6e:2x2x1
jax: 0.10.0
libtpu: 0.0.40
codegen_flags: <defaults>
</compile_context>

<pallas_src>
import math
import functools

import jax
import jax.numpy as jnp
from jax.experimental import pallas as pl
from jax.experimental.pallas import tpu as pltpu


# ---------------------------------------------------------------------------
# Kernel
# ---------------------------------------------------------------------------
def mha_kernel(*refs, n_heads, d_k, compute_dtype, self_attention):
    """Fused MHA forward for one (b_tile, S, D) slab of the batch.

    Block shapes:
      activations       : (b_tile, S, D)  f32
      wqkv              : (D, 3D) if self_attention else (3, D, D), [in, out],
                          Q slab pre-scaled by 1/sqrt(d_k), compute dtype
      bqkv              : (1, 3D) / (3, D)  f32 (Q bias pre-scaled)
      wo                : (D, D)  [in, out], compute dtype
      bo                : (1, D)  f32
      o                 : (b_tile, S, D)
    """
    f32 = jnp.float32
    cd = compute_dtype

    if self_attention:
        x_ref, wqkv_ref, bqkv_ref, wo_ref, bo_ref, o_ref = refs
        bt, S, D = x_ref.shape
        M = bt * S
        # Single wide projection: one MXU pass with 3x wider N.
        x = x_ref[...].reshape(M, D).astype(cd)
        qkv = jnp.dot(x, wqkv_ref[...], preferred_element_type=f32) + bqkv_ref[0]
        q = qkv[:, :D]
        k = qkv[:, D:2 * D]
        v = qkv[:, 2 * D:]
    else:
        q_ref, k_ref, v_ref, wqkv_ref, bqkv_ref, wo_ref, bo_ref, o_ref = refs
        bt, S, D = q_ref.shape
        M = bt * S
        q = jnp.dot(q_ref[...].reshape(M, D).astype(cd), wqkv_ref[0],
                    preferred_element_type=f32) + bqkv_ref[0]
        k = jnp.dot(k_ref[...].reshape(M, D).astype(cd), wqkv_ref[1],
                    preferred_element_type=f32) + bqkv_ref[1]
        v = jnp.dot(v_ref[...].reshape(M, D).astype(cd), wqkv_ref[2],
                    preferred_element_type=f32) + bqkv_ref[2]

    # Cast ONCE for the attention MXU operands (hoisted out of the head loop);
    # softmax math stays f32.  The 1/sqrt(d_k) scale is already in Wq/bq.
    q3 = q.reshape(bt, S, D).astype(cd)
    k3 = k.reshape(bt, S, D).astype(cd)
    v3 = v.reshape(bt, S, D).astype(cd)

    # TODO(synk): mask=None path only; nn.Dropout(p=0.1) is eval-mode identity.
    # TODO(synk): flash-style KV tiling (online softmax) needed for large S.
    ctx_heads = []
    for h in range(n_heads):                       # static unroll, H is small
        lo = h * d_k
        qh = q3[:, :, lo:lo + d_k]                 # (bt, S, d_k)
        kh = k3[:, :, lo:lo + d_k]
        vh = v3[:, :, lo:lo + d_k]

        # Scores contract d_k directly (no materialised K^T).
        s = jnp.einsum('bqd,bkd->bqk', qh, kh,
                       preferred_element_type=f32)               # (bt, S, S)
        s = s - jnp.max(s, axis=-1, keepdims=True)
        p = jnp.exp(s)
        p = (p * pl.reciprocal(jnp.sum(p, axis=-1, keepdims=True),
                               approx=True)).astype(cd)          # cast once
        ctx_heads.append(jnp.einsum('bqk,bkd->bqd', p, vh,
                                    preferred_element_type=f32))  # (bt,S,d_k)

    # Concatenate all heads along D (the PyTorch "concat heads" view) and do
    # ONE full-depth output projection: contraction depth D instead of d_k.
    ctx = jnp.concatenate(ctx_heads, axis=-1).reshape(M, D).astype(cd)
    out = jnp.dot(ctx, wo_ref[...], preferred_element_type=f32) + bo_ref[0]
    o_ref[...] = out.reshape(bt, S, D).astype(o_ref.dtype)  # unmasked lane-dense store


# ---------------------------------------------------------------------------
# VMEM-aware tiling helpers
# ---------------------------------------------------------------------------
def _vmem_budget_bytes():
    """~75% of the per-core VMEM capacity (queried; conservative fallback)."""
    cap = None
    try:
        info = pltpu.get_tpu_info()
        for name in ("vmem_capacity_bytes", "vmem_bytes", "vmem_size_bytes"):
            val = getattr(info, name, None)
            if val:
                cap = int(val)
                break
    except Exception:
        cap = None
    if cap is None:
        cap = 64 * 1024 * 1024          # conservative: v7x per-TensorCore VMEM
    return max(32 * 1024 * 1024, min(cap * 3 // 4, 112 * 1024 * 1024))


def _per_step_vmem_bytes(bt, S, D, n_seq_slabs, cw_bytes, single_buffer_weights):
    """Rough per-grid-step VMEM footprint (bytes)."""
    f32 = 4
    M = bt * S
    slabs = 2 * n_seq_slabs * M * D * f32                       # double-buffered I/O blocks
    wbufs = (1 if single_buffer_weights else 2) * (4 * D * D * cw_bytes + 4 * D * f32)
    interm = (3 * M * D * f32            # q/k/v f32 projections
              + 3 * M * D * cw_bytes     # hoisted MXU-operand casts
              + 2 * bt * S * S * f32     # one head's scores + probs
              + M * D * f32              # collected per-head contexts
              + M * D * (cw_bytes + f32))  # ctx cast + projected output
    return slabs + wbufs + interm


def _choose_b_tile(B, S, D, n_seq_slabs, cw_bytes, single_buffer_weights, budget):
    # Guarantee >= 2 grid steps whenever possible so both v7x TensorCores get
    # work (the batch axis is marked "parallel").
    cap = B if B == 1 else max(1, B // 2)
    best = 1
    for bt in range(1, cap + 1):
        if B % bt:
            continue
        if _per_step_vmem_bytes(bt, S, D, n_seq_slabs, cw_bytes,
                                single_buffer_weights) <= budget:
            best = bt
    return best


# ---------------------------------------------------------------------------
# Wrapper
# ---------------------------------------------------------------------------
def multi_headed_attention(query, key, value, params, *, n_heads,
                           b_tile=None, compute_dtype=jnp.bfloat16,
                           self_attention=None):
    """query/key/value: [B, S, D] float32.  params: dict of wq,bq,wk,bk,wv,bv,wo,bo."""
    B, S, D = query.shape
    assert D % n_heads == 0
    d_k = D // n_heads
    f32 = jnp.float32
    cw_bytes = jnp.dtype(compute_dtype).itemsize

    if self_attention is None:
        self_attention = (query is key) and (key is value)

    # Pre-transpose to [in, out] and fold the 1/sqrt(d_k) scale into the Q
    # projection (zero in-kernel cost).
    scale = 1.0 / math.sqrt(d_k)
    wq_t = params["wq"].T * scale
    wk_t = params["wk"].T
    wv_t = params["wv"].T
    bq = params["bq"] * scale
    bk = params["bk"]
    bv = params["bv"]

    if self_attention:
        wqkv = jnp.concatenate([wq_t, wk_t, wv_t], axis=1).astype(compute_dtype)  # (D, 3D)
        bqkv = jnp.concatenate([bq, bk, bv]).reshape(1, 3 * D).astype(f32)        # (1, 3D)
    else:
        wqkv = jnp.stack([wq_t, wk_t, wv_t], axis=0).astype(compute_dtype)        # (3, D, D)
        bqkv = jnp.stack([bq, bk, bv], axis=0).astype(f32)                        # (3, D)
    wo = params["wo"].T.astype(compute_dtype)                                     # (D, D)
    bo = params["bo"].reshape(1, D).astype(f32)

    n_seq_slabs = (1 if self_attention else 3) + 1   # input activation blocks + output
    budget = _vmem_budget_bytes()
    if b_tile is None:
        b_tile = _choose_b_tile(B, S, D, n_seq_slabs, cw_bytes, True, budget)
    assert B % b_tile == 0

    footprint = _per_step_vmem_bytes(b_tile, S, D, n_seq_slabs, cw_bytes, True)
    vmem_limit = int(min(budget, max(2 * footprint, 32 * 1024 * 1024)))

    cost = pl.CostEstimate(
        flops=8 * B * S * D * D + 4 * B * S * S * D,
        transcendentals=B * n_heads * S * S,
        bytes_accessed=(n_seq_slabs * B * S * D * 4
                        + 4 * D * D * cw_bytes + 8 * D * 4),
    )

    kernel = functools.partial(mha_kernel, n_heads=n_heads, d_k=d_k,
                               compute_dtype=compute_dtype,
                               self_attention=self_attention)

    seq_spec = pl.BlockSpec((b_tile, S, D), lambda b: (b, 0, 0))
    out_spec = pl.BlockSpec((b_tile, S, D), lambda b: (b, 0, 0))

    def const_spec(shape, single_buffer):
        idx = lambda b: (0,) * len(shape)
        if single_buffer:
            # Grid-invariant operand: one pipeline buffer is enough.
            return pl.BlockSpec(shape, idx, pipeline_mode=pl.Buffered(1))
        return pl.BlockSpec(shape, idx)

    def run(single_buffer):
        w_specs = [const_spec(wqkv.shape, single_buffer),
                   const_spec(bqkv.shape, single_buffer),
                   const_spec(wo.shape, single_buffer),
                   const_spec(bo.shape, single_buffer)]
        if self_attention:
            in_specs = [seq_spec] + w_specs
            args = (query, wqkv, bqkv, wo, bo)
        else:
            in_specs = [seq_spec, seq_spec, seq_spec] + w_specs
            args = (query, key, value, wqkv, bqkv, wo, bo)
        return pl.pallas_call(
            kernel,
            out_shape=jax.ShapeDtypeStruct((B, S, D), query.dtype),
            grid_spec=pltpu.PrefetchScalarGridSpec(
                num_scalar_prefetch=0,
                grid=(B // b_tile,),
                in_specs=in_specs,
                out_specs=out_spec,
            ),
            compiler_params=pltpu.CompilerParams(
                dimension_semantics=("parallel",),
                vmem_limit_bytes=vmem_limit),
            cost_estimate=cost,
        )(*args)

    try:
        return run(True)
    except Exception:
        # TODO(synk): pl.Buffered(1) pipeline_mode unsupported on this jax
        #             version; fall back to default double-buffered weights.
        return run(False)


# ---------------------------------------------------------------------------
# Pure-JAX reference and init
# ---------------------------------------------------------------------------
def multi_headed_attention_ref(query, key, value, params, *, n_heads):
    """Pure-JAX reference mirroring the PyTorch forward (mask=None, eval dropout)."""
    B, S, D = query.shape
    d_k = D // n_heads

    def lin(x, w, b):
        return x @ w.T + b

    def split_heads(x):
        return x.reshape(B, S, n_heads, d_k).transpose(0, 2, 1, 3)  # (B, H, S, d_k)

    q = split_heads(lin(query, params["wq"], params["bq"]))
    k = split_heads(lin(key, params["wk"], params["bk"]))
    v = split_heads(lin(value, params["wv"], params["bv"]))

    scores = jnp.einsum("bhqd,bhkd->bhqk", q, k) / math.sqrt(d_k)
    p = jax.nn.softmax(scores, axis=-1)
    x = jnp.einsum("bhqk,bhkd->bhqd", p, v)
    x = x.transpose(0, 2, 1, 3).reshape(B, S, D)
    return lin(x, params["wo"], params["bo"])


def init_params(key, d_model):
    """Deterministic init (PyTorch-style uniform(-1/sqrt(d), 1/sqrt(d)))."""
    bound = 1.0 / math.sqrt(d_model)
    names = ["wq", "bq", "wk", "bk", "wv", "bv", "wo", "bo"]
    keys = jax.random.split(key, len(names))
    params = {}
    for n, k in zip(names, keys):
        shape = (d_model, d_model) if n.startswith("w") else (d_model,)
        params[n] = jax.random.uniform(k, shape, jnp.float32, -bound, bound)
    return params


if __name__ == "__main__":
    B, S, D, H = 2, 8, 32, 4   # batch, seq, d_model, heads  (d_k = 8)

    root = jax.random.PRNGKey(0)
    k_q, k_k, k_v, k_p = jax.random.split(root, 4)

    query = jax.random.normal(k_q, (B, S, D), jnp.float32)
    key_ = jax.random.normal(k_k, (B, S, D), jnp.float32)
    value = jax.random.normal(k_v, (B, S, D), jnp.float32)
    params = init_params(k_p, D)

    ref = multi_headed_attention_ref(query, key_, value, params, n_heads=H)

    # Default bf16 MXU path (distinct q/k/v -> stacked-weight cross-attention path).
    out = jax.block_until_ready(
        multi_headed_attention(query, key_, value, params, n_heads=H))
    assert out.shape == (B, S, D)
    assert jnp.allclose(out, ref, atol=5e-2, rtol=5e-2), (
        f"bf16 max abs err = {jnp.max(jnp.abs(out - ref))}")

    # f32 MXU path (tight tolerance; covers the approximate EUP reciprocal).
    out_f32 = jax.block_until_ready(
        multi_headed_attention(query, key_, value, params, n_heads=H,
                               compute_dtype=jnp.float32))
    assert jnp.allclose(out_f32, ref, atol=5e-3, rtol=5e-3), (
        f"f32 max abs err = {jnp.max(jnp.abs(out_f32 - ref))}")

    # Fused-QKV self-attention path (query is key is value -> one (M,D)@(D,3D) matmul).
    ref_sa = multi_headed_attention_ref(query, query, query, params, n_heads=H)
    out_sa = jax.block_until_ready(
        multi_headed_attention(query, query, query, params, n_heads=H))
    assert jnp.allclose(out_sa, ref_sa, atol=5e-2, rtol=5e-2), (
        f"self-attn bf16 max abs err = {jnp.max(jnp.abs(out_sa - ref_sa))}")

    print("KERNEL_OK")
</pallas_src>

<mosaic_0001>
module attributes {stable_mosaic.version = 11 : i64} {
  func.func @mha_kernel(%arg0: i32, %arg1: memref<1x8x32xf32, #tpu.memory_space<vmem>>, %arg2: memref<1x8x32xf32, #tpu.memory_space<vmem>>, %arg3: memref<1x8x32xf32, #tpu.memory_space<vmem>>, %arg4: memref<3x32x32xbf16, #tpu.memory_space<vmem>>, %arg5: memref<3x32xf32, #tpu.memory_space<vmem>>, %arg6: memref<32x32xbf16, #tpu.memory_space<vmem>>, %arg7: memref<1x32xf32, #tpu.memory_space<vmem>>, %arg8: memref<1x8x32xf32, #tpu.memory_space<vmem>>) attributes {dimension_semantics = [#tpu.dimension_semantics<parallel>], iteration_bounds = array<i64: 2>, scalar_prefetch = 0 : i64, scratch_operands = 0 : i64, tpu.core_type = #tpu.core_type<tc>, window_params = [{transform_indices = @transform_0, window_bounds = array<i64: 1, 8, 32>}, {transform_indices = @transform_1, window_bounds = array<i64: 1, 8, 32>}, {transform_indices = @transform_2, window_bounds = array<i64: 1, 8, 32>}, {pipeline_mode = #tpu.pipeline_mode<synchronous>, transform_indices = @transform_3, window_bounds = array<i64: 3, 32, 32>}, {pipeline_mode = #tpu.pipeline_mode<synchronous>, transform_indices = @transform_4, window_bounds = array<i64: 3, 32>}, {pipeline_mode = #tpu.pipeline_mode<synchronous>, transform_indices = @transform_5, window_bounds = array<i64: 32, 32>}, {pipeline_mode = #tpu.pipeline_mode<synchronous>, transform_indices = @transform_6, window_bounds = array<i64: 1, 32>}, {transform_indices = @transform_7, window_bounds = array<i64: 1, 8, 32>}]} {
    %c0 = arith.constant 0 : index
    %c0_0 = arith.constant 0 : index
    %c0_1 = arith.constant 0 : index
    %0 = vector.load %arg1[%c0, %c0_0, %c0_1] : memref<1x8x32xf32, #tpu.memory_space<vmem>>, vector<1x8x32xf32>
    %1 = vector.shape_cast %0 : vector<1x8x32xf32> to vector<8x32xf32>
    %2 = arith.truncf %1 : vector<8x32xf32> to vector<8x32xbf16>
    %c0_2 = arith.constant 0 : index
    %c0_3 = arith.constant 0 : index
    %c0_4 = arith.constant 0 : index
    %3 = vector.load %arg4[%c0_2, %c0_3, %c0_4] : memref<3x32x32xbf16, #tpu.memory_space<vmem>>, vector<1x32x32xbf16>
    %4 = vector.shape_cast %3 : vector<1x32x32xbf16> to vector<32x32xbf16>
    %cst = arith.constant dense<0.000000e+00> : vector<8x32xf32>
    %5 = tpu.matmul %2, %4, %cst {dimension_numbers = #tpu.dot_dimension_numbers<[1], [0], [0], [1], [0, 0, 1, 1], [], []>} : vector<8x32xbf16>, vector<32x32xbf16>, vector<8x32xf32> -> vector<8x32xf32>
    %c0_5 = arith.constant 0 : index
    %c0_6 = arith.constant 0 : index
    %6 = vector.load %arg5[%c0_5, %c0_6] : memref<3x32xf32, #tpu.memory_space<vmem>>, vector<1x32xf32>
    %7 = vector.shape_cast %6 : vector<1x32xf32> to vector<32xf32>
    %8 = vector.shape_cast %7 : vector<32xf32> to vector<1x32xf32>
    %9 = vector.broadcast %8 : vector<1x32xf32> to vector<8x32xf32>
    %10 = arith.addf %5, %9 : vector<8x32xf32>
    %c0_7 = arith.constant 0 : index
    %c0_8 = arith.constant 0 : index
    %c0_9 = arith.constant 0 : index
    %11 = vector.load %arg2[%c0_7, %c0_8, %c0_9] : memref<1x8x32xf32, #tpu.memory_space<vmem>>, vector<1x8x32xf32>
    %12 = vector.shape_cast %11 : vector<1x8x32xf32> to vector<8x32xf32>
    %13 = arith.truncf %12 : vector<8x32xf32> to vector<8x32xbf16>
    %c1 = arith.constant 1 : index
    %c0_10 = arith.constant 0 : index
    %c0_11 = arith.constant 0 : index
    %14 = vector.load %arg4[%c1, %c0_10, %c0_11] : memref<3x32x32xbf16, #tpu.memory_space<vmem>>, vector<1x32x32xbf16>
    %15 = vector.shape_cast %14 : vector<1x32x32xbf16> to vector<32x32xbf16>
    %cst_12 = arith.constant dense<0.000000e+00> : vector<8x32xf32>
    %16 = tpu.matmul %13, %15, %cst_12 {dimension_numbers = #tpu.dot_dimension_numbers<[1], [0], [0], [1], [0, 0, 1, 1], [], []>} : vector<8x32xbf16>, vector<32x32xbf16>, vector<8x32xf32> -> vector<8x32xf32>
    %c1_13 = arith.constant 1 : index
    %c0_14 = arith.constant 0 : index
    %17 = vector.load %arg5[%c1_13, %c0_14] : memref<3x32xf32, #tpu.memory_space<vmem>>, vector<1x32xf32>
    %18 = vector.shape_cast %17 : vector<1x32xf32> to vector<32xf32>
    %19 = vector.shape_cast %18 : vector<32xf32> to vector<1x32xf32>
    %20 = vector.broadcast %19 : vector<1x32xf32> to vector<8x32xf32>
    %21 = arith.addf %16, %20 : vector<8x32xf32>
    %c0_15 = arith.constant 0 : index
    %c0_16 = arith.constant 0 : index
    %c0_17 = arith.constant 0 : index
    %22 = vector.load %arg3[%c0_15, %c0_16, %c0_17] : memref<1x8x32xf32, #tpu.memory_space<vmem>>, vector<1x8x32xf32>
    %23 = vector.shape_cast %22 : vector<1x8x32xf32> to vector<8x32xf32>
    %24 = arith.truncf %23 : vector<8x32xf32> to vector<8x32xbf16>
    %c2 = arith.constant 2 : index
    %c0_18 = arith.constant 0 : index
    %c0_19 = arith.constant 0 : index
    %25 = vector.load %arg4[%c2, %c0_18, %c0_19] : memref<3x32x32xbf16, #tpu.memory_space<vmem>>, vector<1x32x32xbf16>
    %26 = vector.shape_cast %25 : vector<1x32x32xbf16> to vector<32x32xbf16>
    %cst_20 = arith.constant dense<0.000000e+00> : vector<8x32xf32>
    %27 = tpu.matmul %24, %26, %cst_20 {dimension_numbers = #tpu.dot_dimension_numbers<[1], [0], [0], [1], [0, 0, 1, 1], [], []>} : vector<8x32xbf16>, vector<32x32xbf16>, vector<8x32xf32> -> vector<8x32xf32>
    %c2_21 = arith.constant 2 : index
    %c0_22 = arith.constant 0 : index
    %28 = vector.load %arg5[%c2_21, %c0_22] : memref<3x32xf32, #tpu.memory_space<vmem>>, vector<1x32xf32>
    %29 = vector.shape_cast %28 : vector<1x32xf32> to vector<32xf32>
    %30 = vector.shape_cast %29 : vector<32xf32> to vector<1x32xf32>
    %31 = vector.broadcast %30 : vector<1x32xf32> to vector<8x32xf32>
    %32 = arith.addf %27, %31 : vector<8x32xf32>
    %33 = vector.shape_cast %10 : vector<8x32xf32> to vector<1x8x32xf32>
    %34 = arith.truncf %33 : vector<1x8x32xf32> to vector<1x8x32xbf16>
    %35 = vector.shape_cast %21 : vector<8x32xf32> to vector<1x8x32xf32>
    %36 = arith.truncf %35 : vector<1x8x32xf32> to vector<1x8x32xbf16>
    %37 = vector.shape_cast %32 : vector<8x32xf32> to vector<1x8x32xf32>
    %38 = arith.truncf %37 : vector<1x8x32xf32> to vector<1x8x32xbf16>
    %39 = vector.extract_strided_slice %34 {offsets = [0, 0, 0], sizes = [1, 8, 8], strides = [1, 1, 1]} : vector<1x8x32xbf16> to vector<1x8x8xbf16>
    %40 = vector.extract_strided_slice %36 {offsets = [0, 0, 0], sizes = [1, 8, 8], strides = [1, 1, 1]} : vector<1x8x32xbf16> to vector<1x8x8xbf16>
    %41 = vector.extract_strided_slice %38 {offsets = [0, 0, 0], sizes = [1, 8, 8], strides = [1, 1, 1]} : vector<1x8x32xbf16> to vector<1x8x8xbf16>
    "tpu.trace_start"() <{level = 10 : i32, message = "bqd,bkd->bqk"}> : () -> ()
    %cst_23 = arith.constant dense<0.000000e+00> : vector<1x8x8xf32>
    %42 = tpu.matmul %39, %40, %cst_23 {dimension_numbers = #tpu.dot_dimension_numbers<[2], [2], [1], [1], [0, 0, 0, 1, 1, 1], [0], [0]>} : vector<1x8x8xbf16>, vector<1x8x8xbf16>, vector<1x8x8xf32> -> vector<1x8x8xf32>
    "tpu.trace_stop"() : () -> ()
    %cst_24 = arith.constant dense<0xFF800000> : vector<1x8xf32>
    %43 = vector.multi_reduction <maximumf>, %42, %cst_24 [2] : vector<1x8x8xf32> to vector<1x8xf32>
    %44 = vector.shape_cast %43 : vector<1x8xf32> to vector<1x8x1xf32>
    %45 = vector.broadcast %44 : vector<1x8x1xf32> to vector<1x8x8xf32>
    %46 = arith.subf %42, %45 : vector<1x8x8xf32>
    %47 = math.exp %46 : vector<1x8x8xf32>
    %cst_25 = arith.constant dense<0.000000e+00> : vector<1x8xf32>
    %48 = vector.multi_reduction <add>, %47, %cst_25 [2] : vector<1x8x8xf32> to vector<1x8xf32>
    %49 = vector.shape_cast %48 : vector<1x8xf32> to vector<1x8x1xf32>
    %50 = tpu.reciprocal %49 {approx = true} : vector<1x8x1xf32> -> vector<1x8x1xf32>
    %51 = vector.broadcast %50 : vector<1x8x1xf32> to vector<1x8x8xf32>
    %52 = arith.mulf %47, %51 : vector<1x8x8xf32>
    %53 = arith.truncf %52 : vector<1x8x8xf32> to vector<1x8x8xbf16>
    "tpu.trace_start"() <{level = 10 : i32, message = "bqk,bkd->bqd"}> : () -> ()
    %cst_26 = arith.constant dense<0.000000e+00> : vector<1x8x8xf32>
    %54 = tpu.matmul %53, %41, %cst_26 {dimension_numbers = #tpu.dot_dimension_numbers<[2], [1], [1], [2], [0, 0, 0, 1, 1, 2], [0], [0]>} : vector<1x8x8xbf16>, vector<1x8x8xbf16>, vector<1x8x8xf32> -> vector<1x8x8xf32>
    "tpu.trace_stop"() : () -> ()
    %55 = vector.extract_strided_slice %34 {offsets = [0, 0, 8], sizes = [1, 8, 8], strides = [1, 1, 1]} : vector<1x8x32xbf16> to vector<1x8x8xbf16>
    %56 = vector.extract_strided_slice %36 {offsets = [0, 0, 8], sizes = [1, 8, 8], strides = [1, 1, 1]} : vector<1x8x32xbf16> to vector<1x8x8xbf16>
    %57 = vector.extract_strided_slice %38 {offsets = [0, 0, 8], sizes = [1, 8, 8], strides = [1, 1, 1]} : vector<1x8x32xbf16> to vector<1x8x8xbf16>
    "tpu.trace_start"() <{level = 10 : i32, message = "bqd,bkd->bqk"}> : () -> ()
    %cst_27 = arith.constant dense<0.000000e+00> : vector<1x8x8xf32>
    %58 = tpu.matmul %55, %56, %cst_27 {dimension_numbers = #tpu.dot_dimension_numbers<[2], [2], [1], [1], [0, 0, 0, 1, 1, 1], [0], [0]>} : vector<1x8x8xbf16>, vector<1x8x8xbf16>, vector<1x8x8xf32> -> vector<1x8x8xf32>
    "tpu.trace_stop"() : () -> ()
    %cst_28 = arith.constant dense<0xFF800000> : vector<1x8xf32>
    %59 = vector.multi_reduction <maximumf>, %58, %cst_28 [2] : vector<1x8x8xf32> to vector<1x8xf32>
    %60 = vector.shape_cast %59 : vector<1x8xf32> to vector<1x8x1xf32>
    %61 = vector.broadcast %60 : vector<1x8x1xf32> to vector<1x8x8xf32>
    %62 = arith.subf %58, %61 : vector<1x8x8xf32>
    %63 = math.exp %62 : vector<1x8x8xf32>
    %cst_29 = arith.constant dense<0.000000e+00> : vector<1x8xf32>
    %64 = vector.multi_reduction <add>, %63, %cst_29 [2] : vector<1x8x8xf32> to vector<1x8xf32>
    %65 = vector.shape_cast %64 : vector<1x8xf32> to vector<1x8x1xf32>
    %66 = tpu.reciprocal %65 {approx = true} : vector<1x8x1xf32> -> vector<1x8x1xf32>
    %67 = vector.broadcast %66 : vector<1x8x1xf32> to vector<1x8x8xf32>
    %68 = arith.mulf %63, %67 : vector<1x8x8xf32>
    %69 = arith.truncf %68 : vector<1x8x8xf32> to vector<1x8x8xbf16>
    "tpu.trace_start"() <{level = 10 : i32, message = "bqk,bkd->bqd"}> : () -> ()
    %cst_30 = arith.constant dense<0.000000e+00> : vector<1x8x8xf32>
    %70 = tpu.matmul %69, %57, %cst_30 {dimension_numbers = #tpu.dot_dimension_numbers<[2], [1], [1], [2], [0, 0, 0, 1, 1, 2], [0], [0]>} : vector<1x8x8xbf16>, vector<1x8x8xbf16>, vector<1x8x8xf32> -> vector<1x8x8xf32>
    "tpu.trace_stop"() : () -> ()
    %71 = vector.extract_strided_slice %34 {offsets = [0, 0, 16], sizes = [1, 8, 8], strides = [1, 1, 1]} : vector<1x8x32xbf16> to vector<1x8x8xbf16>
    %72 = vector.extract_strided_slice %36 {offsets = [0, 0, 16], sizes = [1, 8, 8], strides = [1, 1, 1]} : vector<1x8x32xbf16> to vector<1x8x8xbf16>
    %73 = vector.extract_strided_slice %38 {offsets = [0, 0, 16], sizes = [1, 8, 8], strides = [1, 1, 1]} : vector<1x8x32xbf16> to vector<1x8x8xbf16>
    "tpu.trace_start"() <{level = 10 : i32, message = "bqd,bkd->bqk"}> : () -> ()
    %cst_31 = arith.constant dense<0.000000e+00> : vector<1x8x8xf32>
    %74 = tpu.matmul %71, %72, %cst_31 {dimension_numbers = #tpu.dot_dimension_numbers<[2], [2], [1], [1], [0, 0, 0, 1, 1, 1], [0], [0]>} : vector<1x8x8xbf16>, vector<1x8x8xbf16>, vector<1x8x8xf32> -> vector<1x8x8xf32>
    "tpu.trace_stop"() : () -> ()
    %cst_32 = arith.constant dense<0xFF800000> : vector<1x8xf32>
    %75 = vector.multi_reduction <maximumf>, %74, %cst_32 [2] : vector<1x8x8xf32> to vector<1x8xf32>
    %76 = vector.shape_cast %75 : vector<1x8xf32> to vector<1x8x1xf32>
    %77 = vector.broadcast %76 : vector<1x8x1xf32> to vector<1x8x8xf32>
    %78 = arith.subf %74, %77 : vector<1x8x8xf32>
    %79 = math.exp %78 : vector<1x8x8xf32>
    %cst_33 = arith.constant dense<0.000000e+00> : vector<1x8xf32>
    %80 = vector.multi_reduction <add>, %79, %cst_33 [2] : vector<1x8x8xf32> to vector<1x8xf32>
    %81 = vector.shape_cast %80 : vector<1x8xf32> to vector<1x8x1xf32>
    %82 = tpu.reciprocal %81 {approx = true} : vector<1x8x1xf32> -> vector<1x8x1xf32>
    %83 = vector.broadcast %82 : vector<1x8x1xf32> to vector<1x8x8xf32>
    %84 = arith.mulf %79, %83 : vector<1x8x8xf32>
    %85 = arith.truncf %84 : vector<1x8x8xf32> to vector<1x8x8xbf16>
    "tpu.trace_start"() <{level = 10 : i32, message = "bqk,bkd->bqd"}> : () -> ()
    %cst_34 = arith.constant dense<0.000000e+00> : vector<1x8x8xf32>
    %86 = tpu.matmul %85, %73, %cst_34 {dimension_numbers = #tpu.dot_dimension_numbers<[2], [1], [1], [2], [0, 0, 0, 1, 1, 2], [0], [0]>} : vector<1x8x8xbf16>, vector<1x8x8xbf16>, vector<1x8x8xf32> -> vector<1x8x8xf32>
    "tpu.trace_stop"() : () -> ()
    %87 = vector.extract_strided_slice %34 {offsets = [0, 0, 24], sizes = [1, 8, 8], strides = [1, 1, 1]} : vector<1x8x32xbf16> to vector<1x8x8xbf16>
    %88 = vector.extract_strided_slice %36 {offsets = [0, 0, 24], sizes = [1, 8, 8], strides = [1, 1, 1]} : vector<1x8x32xbf16> to vector<1x8x8xbf16>
    %89 = vector.extract_strided_slice %38 {offsets = [0, 0, 24], sizes = [1, 8, 8], strides = [1, 1, 1]} : vector<1x8x32xbf16> to vector<1x8x8xbf16>
    "tpu.trace_start"() <{level = 10 : i32, message = "bqd,bkd->bqk"}> : () -> ()
    %cst_35 = arith.constant dense<0.000000e+00> : vector<1x8x8xf32>
    %90 = tpu.matmul %87, %88, %cst_35 {dimension_numbers = #tpu.dot_dimension_numbers<[2], [2], [1], [1], [0, 0, 0, 1, 1, 1], [0], [0]>} : vector<1x8x8xbf16>, vector<1x8x8xbf16>, vector<1x8x8xf32> -> vector<1x8x8xf32>
    "tpu.trace_stop"() : () -> ()
    %cst_36 = arith.constant dense<0xFF800000> : vector<1x8xf32>
    %91 = vector.multi_reduction <maximumf>, %90, %cst_36 [2] : vector<1x8x8xf32> to vector<1x8xf32>
    %92 = vector.shape_cast %91 : vector<1x8xf32> to vector<1x8x1xf32>
    %93 = vector.broadcast %92 : vector<1x8x1xf32> to vector<1x8x8xf32>
    %94 = arith.subf %90, %93 : vector<1x8x8xf32>
    %95 = math.exp %94 : vector<1x8x8xf32>
    %cst_37 = arith.constant dense<0.000000e+00> : vector<1x8xf32>
    %96 = vector.multi_reduction <add>, %95, %cst_37 [2] : vector<1x8x8xf32> to vector<1x8xf32>
    %97 = vector.shape_cast %96 : vector<1x8xf32> to vector<1x8x1xf32>
    %98 = tpu.reciprocal %97 {approx = true} : vector<1x8x1xf32> -> vector<1x8x1xf32>
    %99 = vector.broadcast %98 : vector<1x8x1xf32> to vector<1x8x8xf32>
    %100 = arith.mulf %95, %99 : vector<1x8x8xf32>
    %101 = arith.truncf %100 : vector<1x8x8xf32> to vector<1x8x8xbf16>
    "tpu.trace_start"() <{level = 10 : i32, message = "bqk,bkd->bqd"}> : () -> ()
    %cst_38 = arith.constant dense<0.000000e+00> : vector<1x8x8xf32>
    %102 = tpu.matmul %101, %89, %cst_38 {dimension_numbers = #tpu.dot_dimension_numbers<[2], [1], [1], [2], [0, 0, 0, 1, 1, 2], [0], [0]>} : vector<1x8x8xbf16>, vector<1x8x8xbf16>, vector<1x8x8xf32> -> vector<1x8x8xf32>
    "tpu.trace_stop"() : () -> ()
    %103 = tpu.concatenate %54, %70, %86, %102 in 2 : vector<1x8x8xf32>, vector<1x8x8xf32>, vector<1x8x8xf32>, vector<1x8x8xf32> -> vector<1x8x32xf32>
    %104 = vector.shape_cast %103 : vector<1x8x32xf32> to vector<8x32xf32>
    %105 = arith.truncf %104 : vector<8x32xf32> to vector<8x32xbf16>
    %c0_39 = arith.constant 0 : index
    %c0_40 = arith.constant 0 : index
    %106 = vector.load %arg6[%c0_39, %c0_40] : memref<32x32xbf16, #tpu.memory_space<vmem>>, vector<32x32xbf16>
    %cst_41 = arith.constant dense<0.000000e+00> : vector<8x32xf32>
    %107 = tpu.matmul %105, %106, %cst_41 {dimension_numbers = #tpu.dot_dimension_numbers<[1], [0], [0], [1], [0, 0, 1, 1], [], []>} : vector<8x32xbf16>, vector<32x32xbf16>, vector<8x32xf32> -> vector<8x32xf32>
    %c0_42 = arith.constant 0 : index
    %c0_43 = arith.constant 0 : index
    %108 = vector.load %arg7[%c0_42, %c0_43] : memref<1x32xf32, #tpu.memory_space<vmem>>, vector<1x32xf32>
    %109 = vector.shape_cast %108 : vector<1x32xf32> to vector<32xf32>
    %110 = vector.shape_cast %109 : vector<32xf32> to vector<1x32xf32>
    %111 = vector.broadcast %110 : vector<1x32xf32> to vector<8x32xf32>
    %112 = arith.addf %107, %111 : vector<8x32xf32>
    %113 = vector.shape_cast %112 : vector<8x32xf32> to vector<1x8x32xf32>
    %c0_44 = arith.constant 0 : index
    %c0_45 = arith.constant 0 : index
    %c0_46 = arith.constant 0 : index
    %114 = vector.load %arg8[%c0_44, %c0_45, %c0_46] : memref<1x8x32xf32, #tpu.memory_space<vmem>>, vector<1x8x32xf32>
    tpu.vector_store %arg8[%c0_44, %c0_45, %c0_46], %113 {strides = array<i32>} : memref<1x8x32xf32, #tpu.memory_space<vmem>>, vector<1x8x32xf32>,
    return
  }
  func.func @transform_0(%arg0: i32) -> (i32, i32, i32) {
    %c0_i32 = arith.constant 0 : i32
    %c0_i32_0 = arith.constant 0 : i32
    %c0_i32_1 = arith.constant 0 : i32
    return %arg0, %c0_i32, %c0_i32_0 : i32, i32, i32
  }
  func.func @transform_1(%arg0: i32) -> (i32, i32, i32) {
    %c0_i32 = arith.constant 0 : i32
    %c0_i32_0 = arith.constant 0 : i32
    %c0_i32_1 = arith.constant 0 : i32
    return %arg0, %c0_i32, %c0_i32_0 : i32, i32, i32
  }
  func.func @transform_2(%arg0: i32) -> (i32, i32, i32) {
    %c0_i32 = arith.constant 0 : i32
    %c0_i32_0 = arith.constant 0 : i32
    %c0_i32_1 = arith.constant 0 : i32
    return %arg0, %c0_i32, %c0_i32_0 : i32, i32, i32
  }
  func.func @transform_3(%arg0: i32) -> (i32, i32, i32) {
    %c0_i32 = arith.constant 0 : i32
    %c0_i32_0 = arith.constant 0 : i32
    %c0_i32_1 = arith.constant 0 : i32
    %c0_i32_2 = arith.constant 0 : i32
    return %c0_i32, %c0_i32_0, %c0_i32_1 : i32, i32, i32
  }
  func.func @transform_4(%arg0: i32) -> (i32, i32) {
    %c0_i32 = arith.constant 0 : i32
    %c0_i32_0 = arith.constant 0 : i32
    %c0_i32_1 = arith.constant 0 : i32
    return %c0_i32, %c0_i32_0 : i32, i32
  }
  func.func @transform_5(%arg0: i32) -> (i32, i32) {
    %c0_i32 = arith.constant 0 : i32
    %c0_i32_0 = arith.constant 0 : i32
    %c0_i32_1 = arith.constant 0 : i32
    return %c0_i32, %c0_i32_0 : i32, i32
  }
  func.func @transform_6(%arg0: i32) -> (i32, i32) {
    %c0_i32 = arith.constant 0 : i32
    %c0_i32_0 = arith.constant 0 : i32
    %c0_i32_1 = arith.constant 0 : i32
    return %c0_i32, %c0_i32_0 : i32, i32
  }
  func.func @transform_7(%arg0: i32) -> (i32, i32, i32) {
    %c0_i32 = arith.constant 0 : i32
    %c0_i32_0 = arith.constant 0 : i32
    %c0_i32_1 = arith.constant 0 : i32
    return %arg0, %c0_i32, %c0_i32_0 : i32, i32, i32
  }
}

module attributes {stable_mosaic.version = 11 : i64} {
  func.func @mha_kernel(%arg0: i32, %arg1: memref<1x8x32xf32, #tpu.memory_space<vmem>>, %arg2: memref<1x8x32xf32, #tpu.memory_space<vmem>>, %arg3: memref<1x8x32xf32, #tpu.memory_space<vmem>>, %arg4: memref<3x32x32xbf16, #tpu.memory_space<vmem>>, %arg5: memref<3x32xf32, #tpu.memory_space<vmem>>, %arg6: memref<32x32xbf16, #tpu.memory_space<vmem>>, %arg7: memref<1x32xf32, #tpu.memory_space<vmem>>, %arg8: memref<1x8x32xf32, #tpu.memory_space<vmem>>) attributes {dimension_semantics = [#tpu.dimension_semantics<parallel>], iteration_bounds = array<i64: 2>, scalar_prefetch = 0 : i64, scratch_operands = 0 : i64, tpu.core_type = #tpu.core_type<tc>, window_params = [{transform_indices = @transform_0, window_bounds = array<i64: 1, 8, 32>}, {transform_indices = @transform_1, window_bounds = array<i64: 1, 8, 32>}, {transform_indices = @transform_2, window_bounds = array<i64: 1, 8, 32>}, {pipeline_mode = #tpu.pipeline_mode<synchronous>, transform_indices = @transform_3, window_bounds = array<i64: 3, 32, 32>}, {pipeline_mode = #tpu.pipeline_mode<synchronous>, transform_indices = @transform_4, window_bounds = array<i64: 3, 32>}, {pipeline_mode = #tpu.pipeline_mode<synchronous>, transform_indices = @transform_5, window_bounds = array<i64: 32, 32>}, {pipeline_mode = #tpu.pipeline_mode<synchronous>, transform_indices = @transform_6, window_bounds = array<i64: 1, 32>}, {transform_indices = @transform_7, window_bounds = array<i64: 1, 8, 32>}]} {
    %c0 = arith.constant 0 : index
    %c0_0 = arith.constant 0 : index
    %c0_1 = arith.constant 0 : index
    %0 = vector.load %arg1[%c0, %c0_0, %c0_1] : memref<1x8x32xf32, #tpu.memory_space<vmem>>, vector<1x8x32xf32>
    %1 = vector.shape_cast %0 : vector<1x8x32xf32> to vector<8x32xf32>
    %2 = arith.truncf %1 : vector<8x32xf32> to vector<8x32xbf16>
    %c0_2 = arith.constant 0 : index
    %c0_3 = arith.constant 0 : index
    %c0_4 = arith.constant 0 : index
    %3 = vector.load %arg4[%c0_2, %c0_3, %c0_4] : memref<3x32x32xbf16, #tpu.memory_space<vmem>>, vector<1x32x32xbf16>
    %4 = vector.shape_cast %3 : vector<1x32x32xbf16> to vector<32x32xbf16>
    %cst = arith.constant dense<0.000000e+00> : vector<8x32xf32>
    %5 = tpu.matmul %2, %4, %cst {dimension_numbers = #tpu.dot_dimension_numbers<[1], [0], [0], [1], [0, 0, 1, 1], [], []>} : vector<8x32xbf16>, vector<32x32xbf16>, vector<8x32xf32> -> vector<8x32xf32>
    %c0_5 = arith.constant 0 : index
    %c0_6 = arith.constant 0 : index
    %6 = vector.load %arg5[%c0_5, %c0_6] : memref<3x32xf32, #tpu.memory_space<vmem>>, vector<1x32xf32>
    %7 = vector.shape_cast %6 : vector<1x32xf32> to vector<32xf32>
    %8 = vector.shape_cast %7 : vector<32xf32> to vector<1x32xf32>
    %9 = vector.broadcast %8 : vector<1x32xf32> to vector<8x32xf32>
    %10 = arith.addf %5, %9 : vector<8x32xf32>
    %c0_7 = arith.constant 0 : index
    %c0_8 = arith.constant 0 : index
    %c0_9 = arith.constant 0 : index
    %11 = vector.load %arg2[%c0_7, %c0_8, %c0_9] : memref<1x8x32xf32, #tpu.memory_space<vmem>>, vector<1x8x32xf32>
    %12 = vector.shape_cast %11 : vector<1x8x32xf32> to vector<8x32xf32>
    %13 = arith.truncf %12 : vector<8x32xf32> to vector<8x32xbf16>
    %c1 = arith.constant 1 : index
    %c0_10 = arith.constant 0 : index
    %c0_11 = arith.constant 0 : index
    %14 = vector.load %arg4[%c1, %c0_10, %c0_11] : memref<3x32x32xbf16, #tpu.memory_space<vmem>>, vector<1x32x32xbf16>
    %15 = vector.shape_cast %14 : vector<1x32x32xbf16> to vector<32x32xbf16>
    %cst_12 = arith.constant dense<0.000000e+00> : vector<8x32xf32>
    %16 = tpu.matmul %13, %15, %cst_12 {dimension_numbers = #tpu.dot_dimension_numbers<[1], [0], [0], [1], [0, 0, 1, 1], [], []>} : vector<8x32xbf16>, vector<32x32xbf16>, vector<8x32xf32> -> vector<8x32xf32>
    %c1_13 = arith.constant 1 : index
    %c0_14 = arith.constant 0 : index
    %17 = vector.load %arg5[%c1_13, %c0_14] : memref<3x32xf32, #tpu.memory_space<vmem>>, vector<1x32xf32>
    %18 = vector.shape_cast %17 : vector<1x32xf32> to vector<32xf32>
    %19 = vector.shape_cast %18 : vector<32xf32> to vector<1x32xf32>
    %20 = vector.broadcast %19 : vector<1x32xf32> to vector<8x32xf32>
    %21 = arith.addf %16, %20 : vector<8x32xf32>
    %c0_15 = arith.constant 0 : index
    %c0_16 = arith.constant 0 : index
    %c0_17 = arith.constant 0 : index
    %22 = vector.load %arg3[%c0_15, %c0_16, %c0_17] : memref<1x8x32xf32, #tpu.memory_space<vmem>>, vector<1x8x32xf32>
    %23 = vector.shape_cast %22 : vector<1x8x32xf32> to vector<8x32xf32>
    %24 = arith.truncf %23 : vector<8x32xf32> to vector<8x32xbf16>
    %c2 = arith.constant 2 : index
    %c0_18 = arith.constant 0 : index
    %c0_19 = arith.constant 0 : index
    %25 = vector.load %arg4[%c2, %c0_18, %c0_19] : memref<3x32x32xbf16, #tpu.memory_space<vmem>>, vector<1x32x32xbf16>
    %26 = vector.shape_cast %25 : vector<1x32x32xbf16> to vector<32x32xbf16>
    %cst_20 = arith.constant dense<0.000000e+00> : vector<8x32xf32>
    %27 = tpu.matmul %24, %26, %cst_20 {dimension_numbers = #tpu.dot_dimension_numbers<[1], [0], [0], [1], [0, 0, 1, 1], [], []>} : vector<8x32xbf16>, vector<32x32xbf16>, vector<8x32xf32> -> vector<8x32xf32>
    %c2_21 = arith.constant 2 : index
    %c0_22 = arith.constant 0 : index
    %28 = vector.load %arg5[%c2_21, %c0_22] : memref<3x32xf32, #tpu.memory_space<vmem>>, vector<1x32xf32>
    %29 = vector.shape_cast %28 : vector<1x32xf32> to vector<32xf32>
    %30 = vector.shape_cast %29 : vector<32xf32> to vector<1x32xf32>
    %31 = vector.broadcast %30 : vector<1x32xf32> to vector<8x32xf32>
    %32 = arith.addf %27, %31 : vector<8x32xf32>
    %33 = vector.shape_cast %10 : vector<8x32xf32> to vector<1x8x32xf32>
    %34 = arith.truncf %33 : vector<1x8x32xf32> to vector<1x8x32xbf16>
    %35 = vector.shape_cast %21 : vector<8x32xf32> to vector<1x8x32xf32>
    %36 = arith.truncf %35 : vector<1x8x32xf32> to vector<1x8x32xbf16>
    %37 = vector.shape_cast %32 : vector<8x32xf32> to vector<1x8x32xf32>
    %38 = arith.truncf %37 : vector<1x8x32xf32> to vector<1x8x32xbf16>
    %39 = vector.extract_strided_slice %34 {offsets = [0, 0, 0], sizes = [1, 8, 8], strides = [1, 1, 1]} : vector<1x8x32xbf16> to vector<1x8x8xbf16>
    %40 = vector.extract_strided_slice %36 {offsets = [0, 0, 0], sizes = [1, 8, 8], strides = [1, 1, 1]} : vector<1x8x32xbf16> to vector<1x8x8xbf16>
    %41 = vector.extract_strided_slice %38 {offsets = [0, 0, 0], sizes = [1, 8, 8], strides = [1, 1, 1]} : vector<1x8x32xbf16> to vector<1x8x8xbf16>
    "tpu.trace_start"() <{level = 10 : i32, message = "bqd,bkd->bqk"}> : () -> ()
    %cst_23 = arith.constant dense<0.000000e+00> : vector<1x8x8xf32>
    %42 = tpu.matmul %39, %40, %cst_23 {dimension_numbers = #tpu.dot_dimension_numbers<[2], [2], [1], [1], [0, 0, 0, 1, 1, 1], [0], [0]>} : vector<1x8x8xbf16>, vector<1x8x8xbf16>, vector<1x8x8xf32> -> vector<1x8x8xf32>
    "tpu.trace_stop"() : () -> ()
    %cst_24 = arith.constant dense<0xFF800000> : vector<1x8xf32>
    %43 = vector.multi_reduction <maximumf>, %42, %cst_24 [2] : vector<1x8x8xf32> to vector<1x8xf32>
    %44 = vector.shape_cast %43 : vector<1x8xf32> to vector<1x8x1xf32>
    %45 = vector.broadcast %44 : vector<1x8x1xf32> to vector<1x8x8xf32>
    %46 = arith.subf %42, %45 : vector<1x8x8xf32>
    %47 = math.exp %46 : vector<1x8x8xf32>
    %cst_25 = arith.constant dense<0.000000e+00> : vector<1x8xf32>
    %48 = vector.multi_reduction <add>, %47, %cst_25 [2] : vector<1x8x8xf32> to vector<1x8xf32>
    %49 = vector.shape_cast %48 : vector<1x8xf32> to vector<1x8x1xf32>
    %50 = tpu.reciprocal %49 {approx = true} : vector<1x8x1xf32> -> vector<1x8x1xf32>
    %51 = vector.broadcast %50 : vector<1x8x1xf32> to vector<1x8x8xf32>
    %52 = arith.mulf %47, %51 : vector<1x8x8xf32>
    %53 = arith.truncf %52 : vector<1x8x8xf32> to vector<1x8x8xbf16>
    "tpu.trace_start"() <{level = 10 : i32, message = "bqk,bkd->bqd"}> : () -> ()
    %cst_26 = arith.constant dense<0.000000e+00> : vector<1x8x8xf32>
    %54 = tpu.matmul %53, %41, %cst_26 {dimension_numbers = #tpu.dot_dimension_numbers<[2], [1], [1], [2], [0, 0, 0, 1, 1, 2], [0], [0]>} : vector<1x8x8xbf16>, vector<1x8x8xbf16>, vector<1x8x8xf32> -> vector<1x8x8xf32>
    "tpu.trace_stop"() : () -> ()
    %55 = vector.extract_strided_slice %34 {offsets = [0, 0, 8], sizes = [1, 8, 8], strides = [1, 1, 1]} : vector<1x8x32xbf16> to vector<1x8x8xbf16>
    %56 = vector.extract_strided_slice %36 {offsets = [0, 0, 8], sizes = [1, 8, 8], strides = [1, 1, 1]} : vector<1x8x32xbf16> to vector<1x8x8xbf16>
    %57 = vector.extract_strided_slice %38 {offsets = [0, 0, 8], sizes = [1, 8, 8], strides = [1, 1, 1]} : vector<1x8x32xbf16> to vector<1x8x8xbf16>
    "tpu.trace_start"() <{level = 10 : i32, message = "bqd,bkd->bqk"}> : () -> ()
    %cst_27 = arith.constant dense<0.000000e+00> : vector<1x8x8xf32>
    %58 = tpu.matmul %55, %56, %cst_27 {dimension_numbers = #tpu.dot_dimension_numbers<[2], [2], [1], [1], [0, 0, 0, 1, 1, 1], [0], [0]>} : vector<1x8x8xbf16>, vector<1x8x8xbf16>, vector<1x8x8xf32> -> vector<1x8x8xf32>
    "tpu.trace_stop"() : () -> ()
    %cst_28 = arith.constant dense<0xFF800000> : vector<1x8xf32>
    %59 = vector.multi_reduction <maximumf>, %58, %cst_28 [2] : vector<1x8x8xf32> to vector<1x8xf32>
    %60 = vector.shape_cast %59 : vector<1x8xf32> to vector<1x8x1xf32>
    %61 = vector.broadcast %60 : vector<1x8x1xf32> to vector<1x8x8xf32>
    %62 = arith.subf %58, %61 : vector<1x8x8xf32>
    %63 = math.exp %62 : vector<1x8x8xf32>
    %cst_29 = arith.constant dense<0.000000e+00> : vector<1x8xf32>
    %64 = vector.multi_reduction <add>, %63, %cst_29 [2] : vector<1x8x8xf32> to vector<1x8xf32>
    %65 = vector.shape_cast %64 : vector<1x8xf32> to vector<1x8x1xf32>
    %66 = tpu.reciprocal %65 {approx = true} : vector<1x8x1xf32> -> vector<1x8x1xf32>
    %67 = vector.broadcast %66 : vector<1x8x1xf32> to vector<1x8x8xf32>
    %68 = arith.mulf %63, %67 : vector<1x8x8xf32>
    %69 = arith.truncf %68 : vector<1x8x8xf32> to vector<1x8x8xbf16>
    "tpu.trace_start"() <{level = 10 : i32, message = "bqk,bkd->bqd"}> : () -> ()
    %cst_30 = arith.constant dense<0.000000e+00> : vector<1x8x8xf32>
    %70 = tpu.matmul %69, %57, %cst_30 {dimension_numbers = #tpu.dot_dimension_numbers<[2], [1], [1], [2], [0, 0, 0, 1, 1, 2], [0], [0]>} : vector<1x8x8xbf16>, vector<1x8x8xbf16>, vector<1x8x8xf32> -> vector<1x8x8xf32>
    "tpu.trace_stop"() : () -> ()
    %71 = vector.extract_strided_slice %34 {offsets = [0, 0, 16], sizes = [1, 8, 8], strides = [1, 1, 1]} : vector<1x8x32xbf16> to vector<1x8x8xbf16>
    %72 = vector.extract_strided_slice %36 {offsets = [0, 0, 16], sizes = [1, 8, 8], strides = [1, 1, 1]} : vector<1x8x32xbf16> to vector<1x8x8xbf16>
    %73 = vector.extract_strided_slice %38 {offsets = [0, 0, 16], sizes = [1, 8, 8], strides = [1, 1, 1]} : vector<1x8x32xbf16> to vector<1x8x8xbf16>
    "tpu.trace_start"() <{level = 10 : i32, message = "bqd,bkd->bqk"}> : () -> ()
    %cst_31 = arith.constant dense<0.000000e+00> : vector<1x8x8xf32>
    %74 = tpu.matmul %71, %72, %cst_31 {dimension_numbers = #tpu.dot_dimension_numbers<[2], [2], [1], [1], [0, 0, 0, 1, 1, 1], [0], [0]>} : vector<1x8x8xbf16>, vector<1x8x8xbf16>, vector<1x8x8xf32> -> vector<1x8x8xf32>
    "tpu.trace_stop"() : () -> ()
    %cst_32 = arith.constant dense<0xFF800000> : vector<1x8xf32>
    %75 = vector.multi_reduction <maximumf>, %74, %cst_32 [2] : vector<1x8x8xf32> to vector<1x8xf32>
    %76 = vector.shape_cast %75 : vector<1x8xf32> to vector<1x8x1xf32>
    %77 = vector.broadcast %76 : vector<1x8x1xf32> to vector<1x8x8xf32>
    %78 = arith.subf %74, %77 : vector<1x8x8xf32>
    %79 = math.exp %78 : vector<1x8x8xf32>
    %cst_33 = arith.constant dense<0.000000e+00> : vector<1x8xf32>
    %80 = vector.multi_reduction <add>, %79, %cst_33 [2] : vector<1x8x8xf32> to vector<1x8xf32>
    %81 = vector.shape_cast %80 : vector<1x8xf32> to vector<1x8x1xf32>
    %82 = tpu.reciprocal %81 {approx = true} : vector<1x8x1xf32> -> vector<1x8x1xf32>
    %83 = vector.broadcast %82 : vector<1x8x1xf32> to vector<1x8x8xf32>
    %84 = arith.mulf %79, %83 : vector<1x8x8xf32>
    %85 = arith.truncf %84 : vector<1x8x8xf32> to vector<1x8x8xbf16>
    "tpu.trace_start"() <{level = 10 : i32, message = "bqk,bkd->bqd"}> : () -> ()
    %cst_34 = arith.constant dense<0.000000e+00> : vector<1x8x8xf32>
    %86 = tpu.matmul %85, %73, %cst_34 {dimension_numbers = #tpu.dot_dimension_numbers<[2], [1], [1], [2], [0, 0, 0, 1, 1, 2], [0], [0]>} : vector<1x8x8xbf16>, vector<1x8x8xbf16>, vector<1x8x8xf32> -> vector<1x8x8xf32>
    "tpu.trace_stop"() : () -> ()
    %87 = vector.extract_strided_slice %34 {offsets = [0, 0, 24], sizes = [1, 8, 8], strides = [1, 1, 1]} : vector<1x8x32xbf16> to vector<1x8x8xbf16>
    %88 = vector.extract_strided_slice %36 {offsets = [0, 0, 24], sizes = [1, 8, 8], strides = [1, 1, 1]} : vector<1x8x32xbf16> to vector<1x8x8xbf16>
    %89 = vector.extract_strided_slice %38 {offsets = [0, 0, 24], sizes = [1, 8, 8], strides = [1, 1, 1]} : vector<1x8x32xbf16> to vector<1x8x8xbf16>
    "tpu.trace_start"() <{level = 10 : i32, message = "bqd,bkd->bqk"}> : () -> ()
    %cst_35 = arith.constant dense<0.000000e+00> : vector<1x8x8xf32>
    %90 = tpu.matmul %87, %88, %cst_35 {dimension_numbers = #tpu.dot_dimension_numbers<[2], [2], [1], [1], [0, 0, 0, 1, 1, 1], [0], [0]>} : vector<1x8x8xbf16>, vector<1x8x8xbf16>, vector<1x8x8xf32> -> vector<1x8x8xf32>
    "tpu.trace_stop"() : () -> ()
    %cst_36 = arith.constant dense<0xFF800000> : vector<1x8xf32>
    %91 = vector.multi_reduction <maximumf>, %90, %cst_36 [2] : vector<1x8x8xf32> to vector<1x8xf32>
    %92 = vector.shape_cast %91 : vector<1x8xf32> to vector<1x8x1xf32>
    %93 = vector.broadcast %92 : vector<1x8x1xf32> to vector<1x8x8xf32>
    %94 = arith.subf %90, %93 : vector<1x8x8xf32>
    %95 = math.exp %94 : vector<1x8x8xf32>
    %cst_37 = arith.constant dense<0.000000e+00> : vector<1x8xf32>
    %96 = vector.multi_reduction <add>, %95, %cst_37 [2] : vector<1x8x8xf32> to vector<1x8xf32>
    %97 = vector.shape_cast %96 : vector<1x8xf32> to vector<1x8x1xf32>
    %98 = tpu.reciprocal %97 {approx = true} : vector<1x8x1xf32> -> vector<1x8x1xf32>
    %99 = vector.broadcast %98 : vector<1x8x1xf32> to vector<1x8x8xf32>
    %100 = arith.mulf %95, %99 : vector<1x8x8xf32>
    %101 = arith.truncf %100 : vector<1x8x8xf32> to vector<1x8x8xbf16>
    "tpu.trace_start"() <{level = 10 : i32, message = "bqk,bkd->bqd"}> : () -> ()
    %cst_38 = arith.constant dense<0.000000e+00> : vector<1x8x8xf32>
    %102 = tpu.matmul %101, %89, %cst_38 {dimension_numbers = #tpu.dot_dimension_numbers<[2], [1], [1], [2], [0, 0, 0, 1, 1, 2], [0], [0]>} : vector<1x8x8xbf16>, vector<1x8x8xbf16>, vector<1x8x8xf32> -> vector<1x8x8xf32>
    "tpu.trace_stop"() : () -> ()
    %103 = tpu.concatenate %54, %70, %86, %102 in 2 : vector<1x8x8xf32>, vector<1x8x8xf32>, vector<1x8x8xf32>, vector<1x8x8xf32> -> vector<1x8x32xf32>
    %104 = vector.shape_cast %103 : vector<1x8x32xf32> to vector<8x32xf32>
    %105 = arith.truncf %104 : vector<8x32xf32> to vector<8x32xbf16>
    %c0_39 = arith.constant 0 : index
    %c0_40 = arith.constant 0 : index
    %106 = vector.load %arg6[%c0_39, %c0_40] : memref<32x32xbf16, #tpu.memory_space<vmem>>, vector<32x32xbf16>
    %cst_41 = arith.constant dense<0.000000e+00> : vector<8x32xf32>
    %107 = tpu.matmul %105, %106, %cst_41 {dimension_numbers = #tpu.dot_dimension_numbers<[1], [0], [0], [1], [0, 0, 1, 1], [], []>} : vector<8x32xbf16>, vector<32x32xbf16>, vector<8x32xf32> -> vector<8x32xf32>
    %c0_42 = arith.constant 0 : index
    %c0_43 = arith.constant 0 : index
    %108 = vector.load %arg7[%c0_42, %c0_43] : memref<1x32xf32, #tpu.memory_space<vmem>>, vector<1x32xf32>
    %109 = vector.shape_cast %108 : vector<1x32xf32> to vector<32xf32>
    %110 = vector.shape_cast %109 : vector<32xf32> to vector<1x32xf32>
    %111 = vector.broadcast %110 : vector<1x32xf32> to vector<8x32xf32>
    %112 = arith.addf %107, %111 : vector<8x32xf32>
    %113 = vector.shape_cast %112 : vector<8x32xf32> to vector<1x8x32xf32>
    %c0_44 = arith.constant 0 : index
    %c0_45 = arith.constant 0 : index
    %c0_46 = arith.constant 0 : index
    %114 = vector.load %arg8[%c0_44, %c0_45, %c0_46] : memref<1x8x32xf32, #tpu.memory_space<vmem>>, vector<1x8x32xf32>
    tpu.vector_store %arg8[%c0_44, %c0_45, %c0_46], %113 {strides = array<i32>} : memref<1x8x32xf32, #tpu.memory_space<vmem>>, vector<1x8x32xf32>,
    return
  }
  func.func @transform_0(%arg0: i32) -> (i32, i32, i32) {
    %c0_i32 = arith.constant 0 : i32
    %c0_i32_0 = arith.constant 0 : i32
    %c0_i32_1 = arith.constant 0 : i32
    return %arg0, %c0_i32, %c0_i32_0 : i32, i32, i32
  }
  func.func @transform_1(%arg0: i32) -> (i32, i32, i32) {
    %c0_i32 = arith.constant 0 : i32
    %c0_i32_0 = arith.constant 0 : i32
    %c0_i32_1 = arith.constant 0 : i32
    return %arg0, %c0_i32, %c0_i32_0 : i32, i32, i32
  }
  func.func @transform_2(%arg0: i32) -> (i32, i32, i32) {
    %c0_i32 = arith.constant 0 : i32
    %c0_i32_0 = arith.constant 0 : i32
    %c0_i32_1 = arith.constant 0 : i32
    return %arg0, %c0_i32, %c0_i32_0 : i32, i32, i32
  }
  func.func @transform_3(%arg0: i32) -> (i32, i32, i32) {
    %c0_i32 = arith.constant 0 : i32
    %c0_i32_0 = arith.constant 0 : i32
    %c0_i32_1 = arith.constant 0 : i32
    %c0_i32_2 = arith.constant 0 : i32
    return %c0_i32, %c0_i32_0, %c0_i32_1 : i32, i32, i32
  }
  func.func @transform_4(%arg0: i32) -> (i32, i32) {
    %c0_i32 = arith.constant 0 : i32
    %c0_i32_0 = arith.constant 0 : i32
    %c0_i32_1 = arith.constant 0 : i32
    return %c0_i32, %c0_i32_0 : i32, i32
  }
  func.func @transform_5(%arg0: i32) -> (i32, i32) {
    %c0_i32 = arith.constant 0 : i32
    %c0_i32_0 = arith.constant 0 : i32
    %c0_i32_1 = arith.constant 0 : i32
    return %c0_i32, %c0_i32_0 : i32, i32
  }
  func.func @transform_6(%arg0: i32) -> (i32, i32) {
    %c0_i32 = arith.constant 0 : i32
    %c0_i32_0 = arith.constant 0 : i32
    %c0_i32_1 = arith.constant 0 : i32
    return %c0_i32, %c0_i32_0 : i32, i32
  }
  func.func @transform_7(%arg0: i32) -> (i32, i32, i32) {
    %c0_i32 = arith.constant 0 : i32
    %c0_i32_0 = arith.constant 0 : i32
    %c0_i32_1 = arith.constant 0 : i32
    return %arg0, %c0_i32, %c0_i32_0 : i32, i32, i32
  }
}

</mosaic_0001>

<llo_original>
// kernel: tpu_custom_call.1
$region0: #{tpu_custom_call.1}
  #allocation0 [shape = 'u32[]', space=smem, size = 0x4, offset = 0x4, fixed_abs, tag = 'smem constant byte address 0x4 - core index']
  #allocation1 [shape = 'u32[144,128]{1,0:T(1,128)}', space=vmem, size = 0x12000, scoped, tag = 'internal scratch']
  %s0 = inlined_call_operand.hbm [shape: f32[2,8,32], index: 0, kind: input, shape index: {}]
  %s1 = inlined_call_operand.hbm [shape: f32[2,8,32], index: 1, kind: input, shape index: {}]
  %s2 = inlined_call_operand.hbm [shape: f32[2,8,32], index: 2, kind: input, shape index: {}]
  %s3 = inlined_call_operand.hbm [shape: bf16[3,32,32], index: 3, kind: input, shape index: {}]
  %s4 = inlined_call_operand.vmem [shape: f32[3,32], index: 4, kind: input, shape index: {}]
  %s5 = inlined_call_operand.hbm [shape: bf16[32,32], index: 5, kind: input, shape index: {}]
  %s6 = inlined_call_operand.vmem [shape: f32[1,32], index: 6, kind: input, shape index: {}]
  %s7 = inlined_call_operand.hbm [shape: f32[2,8,32], index: 7, kind: output, shape index: {}]
  %s8 = sld [smem:[#allocation0]]
  $region81: #{tpu_custom_call.1} parent=0
    _
  %s10 = ssub.s32 1, %s8
  %s11 = scalar_select 0, %s10, %s8
  $region1: #{tpu_custom_call.1} parent=0
    #allocation2 [shape = 'u8[8192]{0}', space=vmem, size = 0x2000, scoped, tag = 'input window, operand 0']
    #allocation3 [shape = 's32[2]{0}', space=sflag, size = 0x8, scoped, tag = 'scoped memory for tpu_custom_call.1']
    #allocation4 [shape = 's32[2]{0}', space=sflag, size = 0x8, scoped, tag = 'scoped memory for tpu_custom_call.1']
    #allocation5 [shape = 'u8[8192]{0}', space=vmem, size = 0x2000, scoped, tag = 'input window, operand 1']
    #allocation6 [shape = 's32[2]{0}', space=sflag, size = 0x8, scoped, tag = 'scoped memory for tpu_custom_call.1']
    #allocation7 [shape = 'u8[8192]{0}', space=vmem, size = 0x2000, scoped, tag = 'input window, operand 2']
    #allocation8 [shape = 'u8[24576]{0}', space=vmem, size = 0x6000, scoped, tag = 'input window, operand 3, single buffered']
    #allocation9 [shape = 's32[1]{0}', space=sflag, size = 0x4, scoped, tag = 'scoped memory for tpu_custom_call.1']
    #allocation10 [shape = 'u8[8192]{0}', space=vmem, size = 0x2000, scoped, tag = 'input window, operand 5, single buffered']
    #allocation11 [shape = 'u8[8192]{0}', space=vmem, size = 0x2000, scoped, tag = 'output window, operand 0']
    %12 = vsyncpa [#allocation3], 0
    %s13 = scalar_lea.sflag [#allocation3], 1
    %14 = vsyncpa %s13, 0
    %15 = vsyncpa [#allocation6], 0
    %s16 = scalar_lea.sflag [#allocation6], 1
    %17 = vsyncpa %s16, 0
    %18 = vsyncpa [#allocation9], 0
    %19 = vsyncpa [#allocation4], 0
    %s20 = scalar_lea.sflag [#allocation4], 1
    %21 = vsyncpa %s20, 0
    loop: start=0, step=1, limit=4
    $region2: #{tpu_custom_call.1} parent=1 // loop_pre_header
      _
    $region3: #{tpu_custom_call.1} parent=1 // loop_header
      %s23 = sphi 0, %s27
      %p24 = scmp.ge.s32.totalorder %s23, 4
      %s33 = sphi 0, %s35
      %s36 = sphi 0, %s33
      %s37 = sphi 0, %s36
      %s53 = sphi 0, %s37
      %s59 = sphi 0, %s61
      %s62 = sphi 0, %s59
      %s63 = sphi 0, %s62
      %s79 = sphi 0, %s63
      %s85 = sphi 0, %s87
      %s88 = sphi 0, %s85
      %s89 = sphi 0, %s88
      %s105 = sphi 0, %s89
      %s109 = sphi 0, %s109
      %s111 = sphi 0, %s109
      %s112 = sphi 0, %s111
      %s126 = sphi 0, %s112
      %s130 = sphi 0, %s130
      %s132 = sphi 0, %s130
      %s133 = sphi 0, %s132
      %s147 = sphi 0, %s133
      %s151 = sphi 0, %s151
      %s153 = sphi 0, %s151
      %s154 = sphi 0, %s153
      %s168 = sphi 0, %s154
      %s172 = sphi 0, %s172
      %s174 = sphi 0, %s172
      %s175 = sphi 0, %s174
      %s189 = sphi 0, %s175
      %s195 = sphi 0, %s197
      %s198 = sphi 0, %s195
      %s199 = sphi 0, %s198
      %s215 = sphi 0, %s199
    $region4: #{tpu_custom_call.1} parent=1 // loop_header_branch
      %26 = sbr.rel (%p24) target = $region8
    $region5: #{tpu_custom_call.1} parent=1 // loop_body
      %s28 = ssub.s32 %s23, 1
      %s29 = ssub.s32 %s23, 2
      %s30 = sadd.s32 %s23, 1
      %s31 = ssub.s32 %s23, %s30
      %p32 = scmp.eq.s32.totalorder %s31, 0
      %s34 = sadd.s32 %s33, 1
      %s35 = scalar_select %p32, %s33, %s34
      %p38 = pneg %p32
      %p39 = scmp.eq.s32.totalorder %s23, 1
      %p40 = por %p38, %p39
      %p41 = scmp.ne.s32.totalorder %s33, %s36
      %p42 = scmp.eq.s32.totalorder %s23, 0
      %p43 = por %p41, %p42
      %p44 = scmp.ne.s32.totalorder %s33, %s36
      %p45 = scmp.eq.s32.totalorder %s28, 1
      %p46 = por %p44, %p45
      %p47 = scmp.ne.s32.totalorder %s36, %s37
      %p48 = scmp.eq.s32.totalorder %s28, 0
      %p49 = por %p47, %p48
      %p50 = scmp.ne.s32.totalorder %s36, %s37
      %p51 = scmp.eq.s32.totalorder %s29, 1
      %p52 = por %p50, %p51
      %p54 = scmp.ne.s32.totalorder %s37, %s53
      %p55 = scmp.eq.s32.totalorder %s29, 0
      %p56 = por %p54, %p55
      %s57 = ssub.s32 %s23, %s30
      %p58 = scmp.eq.s32.totalorder %s57, 0
      %s60 = sadd.s32 %s59, 1
      %s61 = scalar_select %p58, %s59, %s60
      %p64 = pneg %p58
      %p65 = scmp.eq.s32.totalorder %s23, 1
      %p66 = por %p64, %p65
      %p67 = scmp.ne.s32.totalorder %s59, %s62
      %p68 = scmp.eq.s32.totalorder %s23, 0
      %p69 = por %p67, %p68
      %p70 = scmp.ne.s32.totalorder %s59, %s62
      %p71 = scmp.eq.s32.totalorder %s28, 1
      %p72 = por %p70, %p71
      %p73 = scmp.ne.s32.totalorder %s62, %s63
      %p74 = scmp.eq.s32.totalorder %s28, 0
      %p75 = por %p73, %p74
      %p76 = scmp.ne.s32.totalorder %s62, %s63
      %p77 = scmp.eq.s32.totalorder %s29, 1
      %p78 = por %p76, %p77
      %p80 = scmp.ne.s32.totalorder %s63, %s79
      %p81 = scmp.eq.s32.totalorder %s29, 0
      %p82 = por %p80, %p81
      %s83 = ssub.s32 %s23, %s30
      %p84 = scmp.eq.s32.totalorder %s83, 0
      %s86 = sadd.s32 %s85, 1
      %s87 = scalar_select %p84, %s85, %s86
      %p90 = pneg %p84
      %p91 = scmp.eq.s32.totalorder %s23, 1
      %p92 = por %p90, %p91
      %p93 = scmp.ne.s32.totalorder %s85, %s88
      %p94 = scmp.eq.s32.totalorder %s23, 0
      %p95 = por %p93, %p94
      %p96 = scmp.ne.s32.totalorder %s85, %s88
      %p97 = scmp.eq.s32.totalorder %s28, 1
      %p98 = por %p96, %p97
      %p99 = scmp.ne.s32.totalorder %s88, %s89
      %p100 = scmp.eq.s32.totalorder %s28, 0
      %p101 = por %p99, %p100
      %p102 = scmp.ne.s32.totalorder %s88, %s89
      %p103 = scmp.eq.s32.totalorder %s29, 1
      %p104 = por %p102, %p103
      %p106 = scmp.ne.s32.totalorder %s89, %s105
      %p107 = scmp.eq.s32.totalorder %s29, 0
      %p108 = por %p106, %p107
      %s110 = sadd.s32 %s109, 1
      %p113 = scmp.eq.s32.totalorder %s23, 1
      %p114 = scmp.ne.s32.totalorder %s109, %s111
      %p115 = scmp.eq.s32.totalorder %s23, 0
      %p116 = por %p114, %p115
      %p117 = scmp.ne.s32.totalorder %s109, %s111
      %p118 = scmp.eq.s32.totalorder %s28, 1
      %p119 = por %p117, %p118
      %p120 = scmp.ne.s32.totalorder %s111, %s112
      %p121 = scmp.eq.s32.totalorder %s28, 0
      %p122 = por %p120, %p121
      %p123 = scmp.ne.s32.totalorder %s111, %s112
      %p124 = scmp.eq.s32.totalorder %s29, 1
      %p125 = por %p123, %p124
      %p127 = scmp.ne.s32.totalorder %s112, %s126
      %p128 = scmp.eq.s32.totalorder %s29, 0
      %p129 = por %p127, %p128
      %s131 = sadd.s32 %s130, 1
      %p134 = scmp.eq.s32.totalorder %s23, 1
      %p135 = scmp.ne.s32.totalorder %s130, %s132
      %p136 = scmp.eq.s32.totalorder %s23, 0
      %p137 = por %p135, %p136
      %p138 = scmp.ne.s32.totalorder %s130, %s132
      %p139 = scmp.eq.s32.totalorder %s28, 1
      %p140 = por %p138, %p139
      %p141 = scmp.ne.s32.totalorder %s132, %s133
      %p142 = scmp.eq.s32.totalorder %s28, 0
      %p143 = por %p141, %p142
      %p144 = scmp.ne.s32.totalorder %s132, %s133
      %p145 = scmp.eq.s32.totalorder %s29, 1
      %p146 = por %p144, %p145
      %p148 = scmp.ne.s32.totalorder %s133, %s147
      %p149 = scmp.eq.s32.totalorder %s29, 0
      %p150 = por %p148, %p149
      %s152 = sadd.s32 %s151, 1
      %p155 = scmp.eq.s32.totalorder %s23, 1
      %p156 = scmp.ne.s32.totalorder %s151, %s153
      %p157 = scmp.eq.s32.totalorder %s23, 0
      %p158 = por %p156, %p157
      %p159 = scmp.ne.s32.totalorder %s151, %s153
      %p160 = scmp.eq.s32.totalorder %s28, 1
      %p161 = por %p159, %p160
      %p162 = scmp.ne.s32.totalorder %s153, %s154
      %p163 = scmp.eq.s32.totalorder %s28, 0
      %p164 = por %p162, %p163
      %p165 = scmp.ne.s32.totalorder %s153, %s154
      %p166 = scmp.eq.s32.totalorder %s29, 1
      %p167 = por %p165, %p166
      %p169 = scmp.ne.s32.totalorder %s154, %s168
      %p170 = scmp.eq.s32.totalorder %s29, 0
      %p171 = por %p169, %p170
      %s173 = sadd.s32 %s172, 1
      %p176 = scmp.eq.s32.totalorder %s23, 1
      %p177 = scmp.ne.s32.totalorder %s172, %s174
      %p178 = scmp.eq.s32.totalorder %s23, 0
      %p179 = por %p177, %p178
      %p180 = scmp.ne.s32.totalorder %s172, %s174
      %p181 = scmp.eq.s32.totalorder %s28, 1
      %p182 = por %p180, %p181
      %p183 = scmp.ne.s32.totalorder %s174, %s175
      %p184 = scmp.eq.s32.totalorder %s28, 0
      %p185 = por %p183, %p184
      %p186 = scmp.ne.s32.totalorder %s174, %s175
      %p187 = scmp.eq.s32.totalorder %s29, 1
      %p188 = por %p186, %p187
      %p190 = scmp.ne.s32.totalorder %s175, %s189
      %p191 = scmp.eq.s32.totalorder %s29, 0
      %p192 = por %p190, %p191
      %s193 = ssub.s32 %s23, %s30
      %p194 = scmp.eq.s32.totalorder %s193, 0
      %s196 = sadd.s32 %s195, 1
      %s197 = scalar_select %p194, %s195, %s196
      %p200 = pneg %p194
      %p201 = scmp.eq.s32.totalorder %s23, 1
      %p202 = por %p200, %p201
      %p203 = scmp.ne.s32.totalorder %s195, %s198
      %p204 = scmp.eq.s32.totalorder %s23, 0
      %p205 = por %p203, %p204
      %p206 = scmp.ne.s32.totalorder %s195, %s198
      %p207 = scmp.eq.s32.totalorder %s28, 1
      %p208 = por %p206, %p207
      %p209 = scmp.ne.s32.totalorder %s198, %s199
      %p210 = scmp.eq.s32.totalorder %s28, 0
      %p211 = por %p209, %p210
      %p212 = scmp.ne.s32.totalorder %s198, %s199
      %p213 = scmp.eq.s32.totalorder %s29, 1
      %p214 = por %p212, %p213
      %p216 = scmp.ne.s32.totalorder %s199, %s215
      %p217 = scmp.eq.s32.totalorder %s29, 0
      %p218 = por %p216, %p217
      %p219 = scmp.le.s32.totalorder 1, %s23
      %p220 = scmp.lt.s32.totalorder %s23, 3
      %p221 = pnand %p219, %p220
      %p222 = pneg %p221
      // Predicated region
      $region9: #{tpu_custom_call.1} parent=5 // pred_check
        _
      $region10: #{tpu_custom_call.1} parent=5 // pred_check_branch
        %224 = sbr.rel (%p221) target = $region12
      $region11: #{tpu_custom_call.1} parent=5 // pred_region
        %s225 = ssub.s32 %s23, 1
        // Predicated region
        $region13: #{tpu_custom_call.1} parent=11 // pred_check
          %p226 = pneg %p122
        $region14: #{tpu_custom_call.1} parent=11 // pred_check_branch
          %228 = sbr.rel (%p226) target = $region16
        $region15: #{tpu_custom_call.1} parent=11 // pred_region
          %s230 = ssub.s32 768, 768
          %231 = vsyncadd [#allocation9], %s230
          %s232 = sshll.u32 [#allocation8], 4
          %s233 = int_to_ptr.vmem [resolvable:$true] %s232
          %238 = dma.hbm_to_vmem [thread:$0]  %s3, 768, %s233, [#allocation9], 64, 64, 4
        $region16: #{tpu_custom_call.1} parent=11 // pred_fallthru
          _
        // Predicated region
        $region17: #{tpu_custom_call.1} parent=11 // pred_check
          %p239 = pneg %p143
        $region18: #{tpu_custom_call.1} parent=11 // pred_check_branch
          %241 = sbr.rel (%p239) target = $region20
        $region19: #{tpu_custom_call.1} parent=11 // pred_region
          _
        $region20: #{tpu_custom_call.1} parent=11 // pred_fallthru
          _
        // Predicated region
        $region21: #{tpu_custom_call.1} parent=11 // pred_check
          %p242 = pneg %p164
        $region22: #{tpu_custom_call.1} parent=11 // pred_check_branch
          %244 = sbr.rel (%p242) target = $region24
        $region23: #{tpu_custom_call.1} parent=11 // pred_region
          %s246 = ssub.s32 256, 256
          %247 = vsyncadd [#allocation9], %s246
          %s248 = sshll.u32 [#allocation10], 4
          %s249 = int_to_ptr.vmem [resolvable:$true] %s248
          %254 = dma.hbm_to_vmem [thread:$0]  %s5, 256, %s249, [#allocation9], 64, 64, 4
        $region24: #{tpu_custom_call.1} parent=11 // pred_fallthru
          _
        // Predicated region
        $region25: #{tpu_custom_call.1} parent=11 // pred_check
          %p255 = pneg %p185
        $region26: #{tpu_custom_call.1} parent=11 // pred_check_branch
          %257 = sbr.rel (%p255) target = $region28
        $region27: #{tpu_custom_call.1} parent=11 // pred_region
          _
        $region28: #{tpu_custom_call.1} parent=11 // pred_fallthru
          _
      $region12: #{tpu_custom_call.1} parent=5 // pred_fallthru
        _
      %p258 = scmp.lt.s32.totalorder %s23, 2
      // Predicated region
      $region29: #{tpu_custom_call.1} parent=5 // pred_check
        %p259 = pneg %p258
      $region30: #{tpu_custom_call.1} parent=5 // pred_check_branch
        %261 = sbr.rel (%p259) target = $region32
      $region31: #{tpu_custom_call.1} parent=5 // pred_region
        // Predicated region
        $region33: #{tpu_custom_call.1} parent=31 // pred_check
          %p262 = pneg %p43
        $region34: #{tpu_custom_call.1} parent=31 // pred_check_branch
          %264 = sbr.rel (%p262) target = $region36
        $region35: #{tpu_custom_call.1} parent=31 // pred_region
          %s265 = sand.u32 %s33, 1
          %s266 = scalar_lea.sflag [#allocation3], %s265
          %s267 = sand.u32 %s33, 1
          %s268 = smul.addr %s267, 8
          %s269 = scalar_lea.vmem [#allocation2], %s268
          %s271 = ssub.s32 128, 128
          %272 = vsyncadd %s266, %s271
          %s273 = smul.addr %s23, 128
          %s274 = scalar_lea.hbm %s0, %s273
          %s276 = sshll.u32 %s269, 4
          %s277 = int_to_ptr.vmem [resolvable:$true] %s276
          %279 = dma.hbm_to_vmem [thread:$0]  %s274, 128, %s277, %s266
        $region36: #{tpu_custom_call.1} parent=31 // pred_fallthru
          _
        // Predicated region
        $region37: #{tpu_custom_call.1} parent=31 // pred_check
          %p280 = pneg %p69
        $region38: #{tpu_custom_call.1} parent=31 // pred_check_branch
          %282 = sbr.rel (%p280) target = $region40
        $region39: #{tpu_custom_call.1} parent=31 // pred_region
          %s283 = sand.u32 %s23, 1
          %s284 = scalar_lea.sflag [#allocation6], %s283
          %s285 = sand.u32 %s59, 1
          %s286 = smul.addr %s285, 8
          %s287 = scalar_lea.vmem [#allocation5], %s286
          %s289 = ssub.s32 128, 128
          %290 = vsyncadd %s284, %s289
          %s291 = smul.addr %s23, 128
          %s292 = scalar_lea.hbm %s1, %s291
          %s294 = sshll.u32 %s287, 4
          %s295 = int_to_ptr.vmem [resolvable:$true] %s294
          %297 = dma.hbm_to_vmem [thread:$0]  %s292, 128, %s295, %s284
        $region40: #{tpu_custom_call.1} parent=31 // pred_fallthru
          _
        // Predicated region
        $region41: #{tpu_custom_call.1} parent=31 // pred_check
          %p298 = pneg %p95
        $region42: #{tpu_custom_call.1} parent=31 // pred_check_branch
          %300 = sbr.rel (%p298) target = $region44
        $region43: #{tpu_custom_call.1} parent=31 // pred_region
          %s301 = sand.u32 %s23, 1
          %s302 = scalar_lea.sflag [#allocation6], %s301
          %s303 = sand.u32 %s85, 1
          %s304 = smul.addr %s303, 8
          %s305 = scalar_lea.vmem [#allocation7], %s304
          %s307 = ssub.s32 128, 128
          %308 = vsyncadd %s302, %s307
          %s309 = smul.addr %s23, 128
          %s310 = scalar_lea.hbm %s2, %s309
          %s312 = sshll.u32 %s305, 4
          %s313 = int_to_ptr.vmem [resolvable:$true] %s312
          %315 = dma.hbm_to_vmem [thread:$0]  %s310, 128, %s313, %s302
        $region44: #{tpu_custom_call.1} parent=31 // pred_fallthru
          _
      $region32: #{tpu_custom_call.1} parent=5 // pred_fallthru
        _
      %p316 = scmp.le.s32.totalorder 1, %s23
      %p317 = scmp.lt.s32.totalorder %s23, 3
      %p318 = pnand %p316, %p317
      %p319 = pneg %p318
      // Predicated region
      $region45: #{tpu_custom_call.1} parent=5 // pred_check
        _
      $region46: #{tpu_custom_call.1} parent=5 // pred_check_branch
        %321 = sbr.rel (%p318) target = $region48
      $region47: #{tpu_custom_call.1} parent=5 // pred_region
        %s322 = ssub.s32 %s23, 1
        %s323 = sand.u32 %s36, 1
        %s324 = scalar_lea.sflag [#allocation3], %s323
        %s325 = sand.u32 %s36, 1
        %s326 = smul.addr %s325, 8
        %s327 = scalar_lea.vmem [#allocation2], %s326
        // Predicated region
        $region49: #{tpu_custom_call.1} parent=47 // pred_check
          %p328 = pneg %p49
        $region50: #{tpu_custom_call.1} parent=47 // pred_check_branch
          %330 = sbr.rel (%p328) target = $region52
        $region51: #{tpu_custom_call.1} parent=47 // pred_region
          %331 = dma.done %s324, 128
        $region52: #{tpu_custom_call.1} parent=47 // pred_fallthru
          _
        %s332 = sand.u32 %s28, 1
        %s333 = scalar_lea.sflag [#allocation6], %s332
        %s334 = sand.u32 %s62, 1
        %s335 = smul.addr %s334, 8
        %s336 = scalar_lea.vmem [#allocation5], %s335
        // Predicated region
        $region53: #{tpu_custom_call.1} parent=47 // pred_check
          %p337 = pneg %p75
        $region54: #{tpu_custom_call.1} parent=47 // pred_check_branch
          %339 = sbr.rel (%p337) target = $region56
        $region55: #{tpu_custom_call.1} parent=47 // pred_region
          %340 = dma.done %s333, 128
        $region56: #{tpu_custom_call.1} parent=47 // pred_fallthru
          _
        %s341 = sand.u32 %s28, 1
        %s342 = scalar_lea.sflag [#allocation6], %s341
        %s343 = sand.u32 %s88, 1
        %s344 = smul.addr %s343, 8
        %s345 = scalar_lea.vmem [#allocation7], %s344
        // Predicated region
        $region57: #{tpu_custom_call.1} parent=47 // pred_check
          %p346 = pneg %p101
        $region58: #{tpu_custom_call.1} parent=47 // pred_check_branch
          %348 = sbr.rel (%p346) target = $region60
        $region59: #{tpu_custom_call.1} parent=47 // pred_region
          %349 = dma.done %s342, 128
        $region60: #{tpu_custom_call.1} parent=47 // pred_fallthru
          _
        // Predicated region
        $region61: #{tpu_custom_call.1} parent=47 // pred_check
          %p350 = pneg %p122
        $region62: #{tpu_custom_call.1} parent=47 // pred_check_branch
          %352 = sbr.rel (%p350) target = $region64
        $region63: #{tpu_custom_call.1} parent=47 // pred_region
          %353 = dma.done [#allocation9], 768
        $region64: #{tpu_custom_call.1} parent=47 // pred_fallthru
          _
        // Predicated region
        $region65: #{tpu_custom_call.1} parent=47 // pred_check
          %p354 = pneg %p164
        $region66: #{tpu_custom_call.1} parent=47 // pred_check_branch
          %356 = sbr.rel (%p354) target = $region68
        $region67: #{tpu_custom_call.1} parent=47 // pred_region
          %357 = dma.done [#allocation9], 256
        $region68: #{tpu_custom_call.1} parent=47 // pred_fallthru
          _
        %s358 = sand.u32 %s36, 1
        %s359 = scalar_lea.sflag [#allocation3], %s358
        %s360 = sand.u32 %s36, 1
        %s361 = smul.addr %s360, 8
        %s362 = scalar_lea.vmem [#allocation2], %s361
        %p363 = pneg %p49
        %p364 = pneg %p46
        %s365 = sand.u32 %s28, 1
        %s366 = scalar_lea.sflag [#allocation6], %s365
        %s367 = sand.u32 %s62, 1
        %s368 = smul.addr %s367, 8
        %s369 = scalar_lea.vmem [#allocation5], %s368
        %p370 = pneg %p75
        %p371 = pneg %p72
        %s372 = sand.u32 %s28, 1
        %s373 = scalar_lea.sflag [#allocation6], %s372
        %s374 = sand.u32 %s88, 1
        %s375 = smul.addr %s374, 8
        %s376 = scalar_lea.vmem [#allocation7], %s375
        %p377 = pneg %p101
        %p378 = pneg %p98
        %p379 = pneg %p122
        %p380 = pneg %p119
        %p381 = pneg %p143
        %p382 = pneg %p140
        %p383 = pneg %p164
        %p384 = pneg %p161
        %p385 = pneg %p185
        %p386 = pneg %p182
        %p387 = pneg %p211
        %p388 = pneg %p208
        %s389 = sand.u32 %s198, 1
        %s390 = scalar_lea.sflag [#allocation4], %s389
        %s391 = sand.u32 %s198, 1
        %s392 = smul.addr %s391, 8
        %s393 = scalar_lea.vmem [#allocation11], %s392
        %v395 = vld [vmem:[%s327] sm:$0xff]
        %v396 = vpack.c.bf16 %v395, %v395
        %v397 = vld [vmem:[#allocation8] sm:$0xf]
        %v398 = vld [vmem:[#allocation8 + $0x4] sm:$0xf]
        %v399 = vld [vmem:[#allocation8 + $0x8] sm:$0xf]
        %v400 = vld [vmem:[#allocation8 + $0xc] sm:$0xf]
        %v401 = vld [vmem:[%s4] sm:$0x1]
        %v402 = vlaneseq
        %v403 = vshrl.u32 %v402, 7
        %v404 = vsub.s32 0, %v403
        %v405 = vrot.slane %v401, %v404
        %v410 = vunpack.c.l.b16 %v397
        %v411 = vunpack.c.l.b16 %v398
        %v412 = vunpack.c.l.b16 %v399
        %v413 = vunpack.c.l.b16 %v400
        %v414 = vpack.c.b16 %v411, %v410
        %v415 = vpack.c.b16 %v413, %v412
        %vm418 = vcmask 261120
        %v420 = vsel %vm418, %v396, 0
        %422 = vmatprep.subr.bf16.mxu0 0
        %423 = vmatpush1.bf16.msra.mxu0 0
        %424 = vmatprep.subr.bf16.mxu0 0
        %425 = vmatpush1.bf16.msra.mxu0 0
        %426 = vmatprep.subr.bf16.mxu0 0
        %427 = vmatpush1.bf16.msra.mxu0 0
        %428 = vmatprep.subr.bf16.mxu0 0
        %429 = vmatpush1.bf16.msra.mxu0 0
        %430 = vmatprep.subr.bf16.mxu0 0
        %431 = vmatpush1.bf16.msra.mxu0 0
        %432 = vmatprep.subr.bf16.mxu0 0
        %433 = vmatpush1.bf16.msra.mxu0 0
        %434 = vmatprep.subr.bf16.mxu0 0
        %435 = vmatpush1.bf16.msra.mxu0 %v415
        %436 = vmatprep.subr.bf16.mxu0 0
        %437 = vmatpush1.bf16.msra.mxu0 %v414
        %438 = vmatprep.subr.bf16.mxu0 0
        %439 = vmatpush2.bf16.msra.mxu0 0
        %440 = vmatprep.subr.bf16.mxu0 0
        %441 = vmatpush2.bf16.msra.mxu0 0
        %442 = vmatprep.subr.bf16.mxu0 0
        %443 = vmatpush2.bf16.msra.mxu0 0
        %444 = vmatprep.subr.bf16.mxu0 0
        %445 = vmatpush2.bf16.msra.mxu0 0
        %446 = vmatprep.subr.bf16.mxu0 0
        %447 = vmatpush2.bf16.msra.mxu0 0
        %448 = vmatprep.subr.bf16.mxu0 0
        %449 = vmatpush2.bf16.msra.mxu0 0
        %450 = vmatprep.subr.bf16.mxu0 0
        %451 = vmatpush2.bf16.msra.mxu0 0
        %452 = vmatprep.subr.bf16.mxu0 0
        %453 = vmatpush2.bf16.msra.mxu0 0
        %454 = vmatprep.mubr.bf16.mxu0 0
        %455 = vmatmul.mubr.bf16.gmra.mxu0 %v420
        %v456 = vpop.f32.mrf.mxu0
        %v457 = vadd.f32 %v405, %v456
        %v458 = vpop.f32.mrf.mxu0
        %v459 = vpop.f32.mrf.mxu0
        %v460 = vpop.f32.mrf.mxu0
        %461 = vdwg.mxu0
        %v462 = vld [vmem:[%s336] sm:$0xff]
        %v463 = vpack.c.bf16 %v462, %v462
        %s464 = scalar_lea.vmem [#allocation8], 16
        %v465 = vld [vmem:[%s464] sm:$0xf]
        %v466 = vld [vmem:[%s464 + $0x4] sm:$0xf]
        %v467 = vld [vmem:[%s464 + $0x8] sm:$0xf]
        %v468 = vld [vmem:[%s464 + $0xc] sm:$0xf]
        %v469 = vld [vmem:[%s4 + $0x1] sm:$0x1]
        %v470 = vlaneseq
        %v471 = vshrl.u32 %v470, 7
        %v472 = vsub.s32 0, %v471
        %v473 = vrot.slane %v469, %v472
        %v478 = vunpack.c.l.b16 %v465
        %v479 = vunpack.c.l.b16 %v466
        %v480 = vunpack.c.l.b16 %v467
        %v481 = vunpack.c.l.b16 %v468
        %v482 = vpack.c.b16 %v479, %v478
        %v483 = vpack.c.b16 %v481, %v480
        %v487 = vsel %vm418, %v463, 0
        %489 = vmatprep.subr.bf16.mxu0 0
        %490 = vmatpush1.bf16.msra.mxu0 0
        %491 = vmatprep.subr.bf16.mxu0 0
        %492 = vmatpush1.bf16.msra.mxu0 0
        %493 = vmatprep.subr.bf16.mxu0 0
        %494 = vmatpush1.bf16.msra.mxu0 0
        %495 = vmatprep.subr.bf16.mxu0 0
        %496 = vmatpush1.bf16.msra.mxu0 0
        %497 = vmatprep.subr.bf16.mxu0 0
        %498 = vmatpush1.bf16.msra.mxu0 0
        %499 = vmatprep.subr.bf16.mxu0 0
        %500 = vmatpush1.bf16.msra.mxu0 0
        %501 = vmatprep.subr.bf16.mxu0 0
        %502 = vmatpush1.bf16.msra.mxu0 %v483
        %503 = vmatprep.subr.bf16.mxu0 0
        %504 = vmatpush1.bf16.msra.mxu0 %v482
        %505 = vmatprep.subr.bf16.mxu0 0
        %506 = vmatpush2.bf16.msra.mxu0 0
        %507 = vmatprep.subr.bf16.mxu0 0
        %508 = vmatpush2.bf16.msra.mxu0 0
        %509 = vmatprep.subr.bf16.mxu0 0
        %510 = vmatpush2.bf16.msra.mxu0 0
        %511 = vmatprep.subr.bf16.mxu0 0
        %512 = vmatpush2.bf16.msra.mxu0 0
        %513 = vmatprep.subr.bf16.mxu0 0
        %514 = vmatpush2.bf16.msra.mxu0 0
        %515 = vmatprep.subr.bf16.mxu0 0
        %516 = vmatpush2.bf16.msra.mxu0 0
        %517 = vmatprep.subr.bf16.mxu0 0
        %518 = vmatpush2.bf16.msra.mxu0 0
        %519 = vmatprep.subr.bf16.mxu0 0
        %520 = vmatpush2.bf16.msra.mxu0 0
        %521 = vmatprep.mubr.bf16.mxu0 0
        %522 = vmatmul.mubr.bf16.gmra.mxu0 %v487
        %v523 = vpop.f32.mrf.mxu0
        %v524 = vadd.f32 %v473, %v523
        %v525 = vpop.f32.mrf.mxu0
        %v526 = vpop.f32.mrf.mxu0
        %v527 = vpop.f32.mrf.mxu0
        %528 = vdwg.mxu0
        %v529 = vld [vmem:[%s345] sm:$0xff]
        %v530 = vpack.c.bf16 %v529, %v529
        %s531 = scalar_lea.vmem [#allocation8], 32
        %v532 = vld [vmem:[%s531] sm:$0xf]
        %v533 = vld [vmem:[%s531 + $0x4] sm:$0xf]
        %v534 = vld [vmem:[%s531 + $0x8] sm:$0xf]
        %v535 = vld [vmem:[%s531 + $0xc] sm:$0xf]
        %v536 = vld [vmem:[%s4 + $0x2] sm:$0x1]
        %v537 = vlaneseq
        %v538 = vshrl.u32 %v537, 7
        %v539 = vsub.s32 0, %v538
        %v540 = vrot.slane %v536, %v539
        %v545 = vunpack.c.l.b16 %v532
        %v546 = vunpack.c.l.b16 %v533
        %v547 = vunpack.c.l.b16 %v534
        %v548 = vunpack.c.l.b16 %v535
        %v549 = vpack.c.b16 %v546, %v545
        %v550 = vpack.c.b16 %v548, %v547
        %v554 = vsel %vm418, %v530, 0
        %556 = vmatprep.subr.bf16.mxu0 0
        %557 = vmatpush1.bf16.msra.mxu0 0
        %558 = vmatprep.subr.bf16.mxu0 0
        %559 = vmatpush1.bf16.msra.mxu0 0
        %560 = vmatprep.subr.bf16.mxu0 0
        %561 = vmatpush1.bf16.msra.mxu0 0
        %562 = vmatprep.subr.bf16.mxu0 0
        %563 = vmatpush1.bf16.msra.mxu0 0
        %564 = vmatprep.subr.bf16.mxu0 0
        %565 = vmatpush1.bf16.msra.mxu0 0
        %566 = vmatprep.subr.bf16.mxu0 0
        %567 = vmatpush1.bf16.msra.mxu0 0
        %568 = vmatprep.subr.bf16.mxu0 0
        %569 = vmatpush1.bf16.msra.mxu0 %v550
        %570 = vmatprep.subr.bf16.mxu0 0
        %571 = vmatpush1.bf16.msra.mxu0 %v549
        %572 = vmatprep.subr.bf16.mxu0 0
        %573 = vmatpush2.bf16.msra.mxu0 0
        %574 = vmatprep.subr.bf16.mxu0 0
        %575 = vmatpush2.bf16.msra.mxu0 0
        %576 = vmatprep.subr.bf16.mxu0 0
        %577 = vmatpush2.bf16.msra.mxu0 0
        %578 = vmatprep.subr.bf16.mxu0 0
        %579 = vmatpush2.bf16.msra.mxu0 0
        %580 = vmatprep.subr.bf16.mxu0 0
        %581 = vmatpush2.bf16.msra.mxu0 0
        %582 = vmatprep.subr.bf16.mxu0 0
        %583 = vmatpush2.bf16.msra.mxu0 0
        %584 = vmatprep.subr.bf16.mxu0 0
        %585 = vmatpush2.bf16.msra.mxu0 0
        %586 = vmatprep.subr.bf16.mxu0 0
        %587 = vmatpush2.bf16.msra.mxu0 0
        %588 = vmatprep.mubr.bf16.mxu0 0
        %589 = vmatmul.mubr.bf16.gmra.mxu0 %v554
        %v590 = vpop.f32.mrf.mxu0
        %v591 = vadd.f32 %v540, %v590
        %v592 = vpop.f32.mrf.mxu0
        %v593 = vpop.f32.mrf.mxu0
        %v594 = vpop.f32.mrf.mxu0
        %595 = vdwg.mxu0
        %v596 = vpack.c.bf16 %v457, %v457
        %v597 = vpack.c.bf16 %v524, %v524
        %v598 = vpack.c.bf16 %v591, %v591
        %vm599 = vcmask 64512
        %v601 = vsel %vm599, %v596, 0
        %v604 = vsel %vm599, %v597, 0
        %606 = vmatprep.subr.bf16.mxu0 0
        %607 = vmatpush1.bf16.xpose.msra.mxu0 0
        %608 = vmatprep.subr.bf16.mxu0 0
        %609 = vmatpush1.bf16.xpose.msra.mxu0 0
        %610 = vmatprep.subr.bf16.mxu0 0
        %611 = vmatpush1.bf16.xpose.msra.mxu0 0
        %612 = vmatprep.subr.bf16.mxu0 0
        %613 = vmatpush1.bf16.xpose.msra.mxu0 0
        %614 = vmatprep.subr.bf16.mxu0 0
        %615 = vmatpush1.bf16.xpose.msra.mxu0 0
        %616 = vmatprep.subr.bf16.mxu0 0
        %617 = vmatpush1.bf16.xpose.msra.mxu0 0
        %618 = vmatprep.subr.bf16.mxu0 0
        %619 = vmatpush1.bf16.xpose.msra.mxu0 0
        %620 = vmatprep.subr.bf16.mxu0 0
        %621 = vmatpush1.bf16.xpose.msra.mxu0 %v604
        %622 = vmatprep.subr.bf16.mxu0 0
        %623 = vmatpush2.bf16.xpose.msra.mxu0 0
        %624 = vmatprep.subr.bf16.mxu0 0
        %625 = vmatpush2.bf16.xpose.msra.mxu0 0
        %626 = vmatprep.subr.bf16.mxu0 0
        %627 = vmatpush2.bf16.xpose.msra.mxu0 0
        %628 = vmatprep.subr.bf16.mxu0 0
        %629 = vmatpush2.bf16.xpose.msra.mxu0 0
        %630 = vmatprep.subr.bf16.mxu0 0
        %631 = vmatpush2.bf16.xpose.msra.mxu0 0
        %632 = vmatprep.subr.bf16.mxu0 0
        %633 = vmatpush2.bf16.xpose.msra.mxu0 0
        %634 = vmatprep.subr.bf16.mxu0 0
        %635 = vmatpush2.bf16.xpose.msra.mxu0 0
        %636 = vmatprep.subr.bf16.mxu0 0
        %637 = vmatpush2.bf16.xpose.msra.mxu0 0
        %638 = vmatprep.mubr.bf16.mxu0 0
        %639 = vmatmul.mubr.bf16.gmra.mxu0 %v601
        %v640 = vpop.f32.mrf.mxu0
        %v641 = vadd.f32 0.0, %v640
        %v642 = vpop.f32.mrf.mxu0
        %v643 = vpop.f32.mrf.mxu0
        %v644 = vpop.f32.mrf.mxu0
        %645 = vdwg.mxu0
        %v646 = vsel %vm599, %v641, -inf
        %647 = vmax.xlane.f32.xlu0 %v646
        %v648 = vpop.xlane.xlu0 %647
        %v649 = vsub.f32 %v641, %v648
        %v650 = vmul.f32 %v649, 1.442695
        %v651 = vpow.pop %v650
        %v652 = vsel %vm599, %v651, 0.0
        %653 = vadd.xlane.f32.xlu0 %v652
        %v654 = vpop.xlane.xlu0 %653
        %v655 = vrcp.pop %v654
        %v656 = vmul.f32 %v651, %v655
        %v657 = vpack.c.bf16 %v656, %v656
        %v659 = vsel %vm599, %v657, 0
        %vm661 = vcmask 1043456
        %v663 = vsel %vm661, %v598, 0
        %665 = vmatprep.subr.bf16.mxu0 0
        %666 = vmatpush1.bf16.msra.mxu0 0
        %667 = vmatprep.subr.bf16.mxu0 0
        %668 = vmatpush1.bf16.msra.mxu0 0
        %669 = vmatprep.subr.bf16.mxu0 0
        %670 = vmatpush1.bf16.msra.mxu0 0
        %671 = vmatprep.subr.bf16.mxu0 0
        %672 = vmatpush1.bf16.msra.mxu0 0
        %673 = vmatprep.subr.bf16.mxu0 0
        %674 = vmatpush1.bf16.msra.mxu0 0
        %675 = vmatprep.subr.bf16.mxu0 0
        %676 = vmatpush1.bf16.msra.mxu0 0
        %677 = vmatprep.subr.bf16.mxu0 0
        %678 = vmatpush1.bf16.msra.mxu0 0
        %679 = vmatprep.subr.bf16.mxu0 0
        %680 = vmatpush1.bf16.msra.mxu0 %v663
        %681 = vmatprep.subr.bf16.mxu0 0
        %682 = vmatpush2.bf16.msra.mxu0 0
        %683 = vmatprep.subr.bf16.mxu0 0
        %684 = vmatpush2.bf16.msra.mxu0 0
        %685 = vmatprep.subr.bf16.mxu0 0
        %686 = vmatpush2.bf16.msra.mxu0 0
        %687 = vmatprep.subr.bf16.mxu0 0
        %688 = vmatpush2.bf16.msra.mxu0 0
        %689 = vmatprep.subr.bf16.mxu0 0
        %690 = vmatpush2.bf16.msra.mxu0 0
        %691 = vmatprep.subr.bf16.mxu0 0
        %692 = vmatpush2.bf16.msra.mxu0 0
        %693 = vmatprep.subr.bf16.mxu0 0
        %694 = vmatpush2.bf16.msra.mxu0 0
        %695 = vmatprep.subr.bf16.mxu0 0
        %696 = vmatpush2.bf16.msra.mxu0 0
        %697 = vmatprep.mubr.bf16.mxu0 0
        %698 = vmatmul.mubr.bf16.gmra.mxu0 %v659
        %v699 = vpop.f32.mrf.mxu0
        %v700 = vadd.f32 0.0, %v699
        %v701 = vpop.f32.mrf.mxu0
        %v702 = vpop.f32.mrf.mxu0
        %v703 = vpop.f32.mrf.mxu0
        %704 = vdwg.mxu0
        %706 = vrot.lane.b32.xlu0 %v596, 120
        %v707 = vpop.permute.xlu0 %706
        %709 = vrot.lane.b32.xlu0 %v597, 120
        %v710 = vpop.permute.xlu0 %709
        %v712 = vsel %vm599, %v707, 0
        %v715 = vsel %vm599, %v710, 0
        %717 = vmatprep.subr.bf16.mxu0 0
        %718 = vmatpush1.bf16.xpose.msra.mxu0 0
        %719 = vmatprep.subr.bf16.mxu0 0
        %720 = vmatpush1.bf16.xpose.msra.mxu0 0
        %721 = vmatprep.subr.bf16.mxu0 0
        %722 = vmatpush1.bf16.xpose.msra.mxu0 0
        %723 = vmatprep.subr.bf16.mxu0 0
        %724 = vmatpush1.bf16.xpose.msra.mxu0 0
        %725 = vmatprep.subr.bf16.mxu0 0
        %726 = vmatpush1.bf16.xpose.msra.mxu0 0
        %727 = vmatprep.subr.bf16.mxu0 0
        %728 = vmatpush1.bf16.xpose.msra.mxu0 0
        %729 = vmatprep.subr.bf16.mxu0 0
        %730 = vmatpush1.bf16.xpose.msra.mxu0 0
        %731 = vmatprep.subr.bf16.mxu0 0
        %732 = vmatpush1.bf16.xpose.msra.mxu0 %v715
        %733 = vmatprep.subr.bf16.mxu0 0
        %734 = vmatpush2.bf16.xpose.msra.mxu0 0
        %735 = vmatprep.subr.bf16.mxu0 0
        %736 = vmatpush2.bf16.xpose.msra.mxu0 0
        %737 = vmatprep.subr.bf16.mxu0 0
        %738 = vmatpush2.bf16.xpose.msra.mxu0 0
        %739 = vmatprep.subr.bf16.mxu0 0
        %740 = vmatpush2.bf16.xpose.msra.mxu0 0
        %741 = vmatprep.subr.bf16.mxu0 0
        %742 = vmatpush2.bf16.xpose.msra.mxu0 0
        %743 = vmatprep.subr.bf16.mxu0 0
        %744 = vmatpush2.bf16.xpose.msra.mxu0 0
        %745 = vmatprep.subr.bf16.mxu0 0
        %746 = vmatpush2.bf16.xpose.msra.mxu0 0
        %747 = vmatprep.subr.bf16.mxu0 0
        %748 = vmatpush2.bf16.xpose.msra.mxu0 0
        %749 = vmatprep.mubr.bf16.mxu0 0
        %750 = vmatmul.mubr.bf16.gmra.mxu0 %v712
        %v751 = vpop.f32.mrf.mxu0
        %v752 = vadd.f32 0.0, %v751
        %v753 = vpop.f32.mrf.mxu0
        %v754 = vpop.f32.mrf.mxu0
        %v755 = vpop.f32.mrf.mxu0
        %756 = vdwg.mxu0
        %v757 = vsel %vm599, %v752, -inf
        %758 = vmax.xlane.f32.xlu0 %v757
        %v759 = vpop.xlane.xlu0 %758
        %v760 = vsub.f32 %v752, %v759
        %v761 = vmul.f32 %v760, 1.442695
        %v762 = vpow.pop %v761
        %v763 = vsel %vm599, %v762, 0.0
        %764 = vadd.xlane.f32.xlu0 %v763
        %v765 = vpop.xlane.xlu0 %764
        %v766 = vrcp.pop %v765
        %v767 = vmul.f32 %v762, %v766
        %v768 = vpack.c.bf16 %v767, %v767
        %770 = vrot.lane.b32.xlu0 %v598, 120
        %v771 = vpop.permute.xlu0 %770
        %v773 = vsel %vm599, %v768, 0
        %v776 = vsel %vm661, %v771, 0
        %778 = vmatprep.subr.bf16.mxu0 0
        %779 = vmatpush1.bf16.msra.mxu0 0
        %780 = vmatprep.subr.bf16.mxu0 0
        %781 = vmatpush1.bf16.msra.mxu0 0
        %782 = vmatprep.subr.bf16.mxu0 0
        %783 = vmatpush1.bf16.msra.mxu0 0
        %784 = vmatprep.subr.bf16.mxu0 0
        %785 = vmatpush1.bf16.msra.mxu0 0
        %786 = vmatprep.subr.bf16.mxu0 0
        %787 = vmatpush1.bf16.msra.mxu0 0
        %788 = vmatprep.subr.bf16.mxu0 0
        %789 = vmatpush1.bf16.msra.mxu0 0
        %790 = vmatprep.subr.bf16.mxu0 0
        %791 = vmatpush1.bf16.msra.mxu0 0
        %792 = vmatprep.subr.bf16.mxu0 0
        %793 = vmatpush1.bf16.msra.mxu0 %v776
        %794 = vmatprep.subr.bf16.mxu0 0
        %795 = vmatpush2.bf16.msra.mxu0 0
        %796 = vmatprep.subr.bf16.mxu0 0
        %797 = vmatpush2.bf16.msra.mxu0 0
        %798 = vmatprep.subr.bf16.mxu0 0
        %799 = vmatpush2.bf16.msra.mxu0 0
        %800 = vmatprep.subr.bf16.mxu0 0
        %801 = vmatpush2.bf16.msra.mxu0 0
        %802 = vmatprep.subr.bf16.mxu0 0
        %803 = vmatpush2.bf16.msra.mxu0 0
        %804 = vmatprep.subr.bf16.mxu0 0
        %805 = vmatpush2.bf16.msra.mxu0 0
        %806 = vmatprep.subr.bf16.mxu0 0
        %807 = vmatpush2.bf16.msra.mxu0 0
        %808 = vmatprep.subr.bf16.mxu0 0
        %809 = vmatpush2.bf16.msra.mxu0 0
        %810 = vmatprep.mubr.bf16.mxu0 0
        %811 = vmatmul.mubr.bf16.gmra.mxu0 %v773
        %v812 = vpop.f32.mrf.mxu0
        %v813 = vadd.f32 0.0, %v812
        %v814 = vpop.f32.mrf.mxu0
        %v815 = vpop.f32.mrf.mxu0
        %v816 = vpop.f32.mrf.mxu0
        %817 = vdwg.mxu0
        %818 = vrot.lane.b32.xlu0 %v596, 112
        %v819 = vpop.permute.xlu0 %818
        %820 = vrot.lane.b32.xlu0 %v597, 112
        %v821 = vpop.permute.xlu0 %820
        %v823 = vsel %vm599, %v819, 0
        %v826 = vsel %vm599, %v821, 0
        %828 = vmatprep.subr.bf16.mxu0 0
        %829 = vmatpush1.bf16.xpose.msra.mxu0 0
        %830 = vmatprep.subr.bf16.mxu0 0
        %831 = vmatpush1.bf16.xpose.msra.mxu0 0
        %832 = vmatprep.subr.bf16.mxu0 0
        %833 = vmatpush1.bf16.xpose.msra.mxu0 0
        %834 = vmatprep.subr.bf16.mxu0 0
        %835 = vmatpush1.bf16.xpose.msra.mxu0 0
        %836 = vmatprep.subr.bf16.mxu0 0
        %837 = vmatpush1.bf16.xpose.msra.mxu0 0
        %838 = vmatprep.subr.bf16.mxu0 0
        %839 = vmatpush1.bf16.xpose.msra.mxu0 0
        %840 = vmatprep.subr.bf16.mxu0 0
        %841 = vmatpush1.bf16.xpose.msra.mxu0 0
        %842 = vmatprep.subr.bf16.mxu0 0
        %843 = vmatpush1.bf16.xpose.msra.mxu0 %v826
        %844 = vmatprep.subr.bf16.mxu0 0
        %845 = vmatpush2.bf16.xpose.msra.mxu0 0
        %846 = vmatprep.subr.bf16.mxu0 0
        %847 = vmatpush2.bf16.xpose.msra.mxu0 0
        %848 = vmatprep.subr.bf16.mxu0 0
        %849 = vmatpush2.bf16.xpose.msra.mxu0 0
        %850 = vmatprep.subr.bf16.mxu0 0
        %851 = vmatpush2.bf16.xpose.msra.mxu0 0
        %852 = vmatprep.subr.bf16.mxu0 0
        %853 = vmatpush2.bf16.xpose.msra.mxu0 0
        %854 = vmatprep.subr.bf16.mxu0 0
        %855 = vmatpush2.bf16.xpose.msra.mxu0 0
        %856 = vmatprep.subr.bf16.mxu0 0
        %857 = vmatpush2.bf16.xpose.msra.mxu0 0
        %858 = vmatprep.subr.bf16.mxu0 0
        %859 = vmatpush2.bf16.xpose.msra.mxu0 0
        %860 = vmatprep.mubr.bf16.mxu0 0
        %861 = vmatmul.mubr.bf16.gmra.mxu0 %v823
        %v862 = vpop.f32.mrf.mxu0
        %v863 = vadd.f32 0.0, %v862
        %v864 = vpop.f32.mrf.mxu0
        %v865 = vpop.f32.mrf.mxu0
        %v866 = vpop.f32.mrf.mxu0
        %867 = vdwg.mxu0
        %v868 = vsel %vm599, %v863, -inf
        %869 = vmax.xlane.f32.xlu0 %v868
        %v870 = vpop.xlane.xlu0 %869
        %v871 = vsub.f32 %v863, %v870
        %v872 = vmul.f32 %v871, 1.442695
        %v873 = vpow.pop %v872
        %v874 = vsel %vm599, %v873, 0.0
        %875 = vadd.xlane.f32.xlu0 %v874
        %v876 = vpop.xlane.xlu0 %875
        %v877 = vrcp.pop %v876
        %v878 = vmul.f32 %v873, %v877
        %v879 = vpack.c.bf16 %v878, %v878
        %880 = vrot.lane.b32.xlu0 %v598, 112
        %v881 = vpop.permute.xlu0 %880
        %v883 = vsel %vm599, %v879, 0
        %v886 = vsel %vm661, %v881, 0
        %888 = vmatprep.subr.bf16.mxu0 0
        %889 = vmatpush1.bf16.msra.mxu0 0
        %890 = vmatprep.subr.bf16.mxu0 0
        %891 = vmatpush1.bf16.msra.mxu0 0
        %892 = vmatprep.subr.bf16.mxu0 0
        %893 = vmatpush1.bf16.msra.mxu0 0
        %894 = vmatprep.subr.bf16.mxu0 0
        %895 = vmatpush1.bf16.msra.mxu0 0
        %896 = vmatprep.subr.bf16.mxu0 0
        %897 = vmatpush1.bf16.msra.mxu0 0
        %898 = vmatprep.subr.bf16.mxu0 0
        %899 = vmatpush1.bf16.msra.mxu0 0
        %900 = vmatprep.subr.bf16.mxu0 0
        %901 = vmatpush1.bf16.msra.mxu0 0
        %902 = vmatprep.subr.bf16.mxu0 0
        %903 = vmatpush1.bf16.msra.mxu0 %v886
        %904 = vmatprep.subr.bf16.mxu0 0
        %905 = vmatpush2.bf16.msra.mxu0 0
        %906 = vmatprep.subr.bf16.mxu0 0
        %907 = vmatpush2.bf16.msra.mxu0 0
        %908 = vmatprep.subr.bf16.mxu0 0
        %909 = vmatpush2.bf16.msra.mxu0 0
        %910 = vmatprep.subr.bf16.mxu0 0
        %911 = vmatpush2.bf16.msra.mxu0 0
        %912 = vmatprep.subr.bf16.mxu0 0
        %913 = vmatpush2.bf16.msra.mxu0 0
        %914 = vmatprep.subr.bf16.mxu0 0
        %915 = vmatpush2.bf16.msra.mxu0 0
        %916 = vmatprep.subr.bf16.mxu0 0
        %917 = vmatpush2.bf16.msra.mxu0 0
        %918 = vmatprep.subr.bf16.mxu0 0
        %919 = vmatpush2.bf16.msra.mxu0 0
        %920 = vmatprep.mubr.bf16.mxu0 0
        %921 = vmatmul.mubr.bf16.gmra.mxu0 %v883
        %v922 = vpop.f32.mrf.mxu0
        %v923 = vadd.f32 0.0, %v922
        %v924 = vpop.f32.mrf.mxu0
        %v925 = vpop.f32.mrf.mxu0
        %v926 = vpop.f32.mrf.mxu0
        %927 = vdwg.mxu0
        %928 = vrot.lane.b32.xlu0 %v596, 104
        %v929 = vpop.permute.xlu0 %928
        %930 = vrot.lane.b32.xlu0 %v597, 104
        %v931 = vpop.permute.xlu0 %930
        %v933 = vsel %vm599, %v929, 0
        %v936 = vsel %vm599, %v931, 0
        %938 = vmatprep.subr.bf16.mxu0 0
        %939 = vmatpush1.bf16.xpose.msra.mxu0 0
        %940 = vmatprep.subr.bf16.mxu0 0
        %941 = vmatpush1.bf16.xpose.msra.mxu0 0
        %942 = vmatprep.subr.bf16.mxu0 0
        %943 = vmatpush1.bf16.xpose.msra.mxu0 0
        %944 = vmatprep.subr.bf16.mxu0 0
        %945 = vmatpush1.bf16.xpose.msra.mxu0 0
        %946 = vmatprep.subr.bf16.mxu0 0
        %947 = vmatpush1.bf16.xpose.msra.mxu0 0
        %948 = vmatprep.subr.bf16.mxu0 0
        %949 = vmatpush1.bf16.xpose.msra.mxu0 0
        %950 = vmatprep.subr.bf16.mxu0 0
        %951 = vmatpush1.bf16.xpose.msra.mxu0 0
        %952 = vmatprep.subr.bf16.mxu0 0
        %953 = vmatpush1.bf16.xpose.msra.mxu0 %v936
        %954 = vmatprep.subr.bf16.mxu0 0
        %955 = vmatpush2.bf16.xpose.msra.mxu0 0
        %956 = vmatprep.subr.bf16.mxu0 0
        %957 = vmatpush2.bf16.xpose.msra.mxu0 0
        %958 = vmatprep.subr.bf16.mxu0 0
        %959 = vmatpush2.bf16.xpose.msra.mxu0 0
        %960 = vmatprep.subr.bf16.mxu0 0
        %961 = vmatpush2.bf16.xpose.msra.mxu0 0
        %962 = vmatprep.subr.bf16.mxu0 0
        %963 = vmatpush2.bf16.xpose.msra.mxu0 0
        %964 = vmatprep.subr.bf16.mxu0 0
        %965 = vmatpush2.bf16.xpose.msra.mxu0 0
        %966 = vmatprep.subr.bf16.mxu0 0
        %967 = vmatpush2.bf16.xpose.msra.mxu0 0
        %968 = vmatprep.subr.bf16.mxu0 0
        %969 = vmatpush2.bf16.xpose.msra.mxu0 0
        %970 = vmatprep.mubr.bf16.mxu0 0
        %971 = vmatmul.mubr.bf16.gmra.mxu0 %v933
        %v972 = vpop.f32.mrf.mxu0
        %v973 = vadd.f32 0.0, %v972
        %v974 = vpop.f32.mrf.mxu0
        %v975 = vpop.f32.mrf.mxu0
        %v976 = vpop.f32.mrf.mxu0
        %977 = vdwg.mxu0
        %v978 = vsel %vm599, %v973, -inf
        %979 = vmax.xlane.f32.xlu0 %v978
        %v980 = vpop.xlane.xlu0 %979
        %v981 = vsub.f32 %v973, %v980
        %v982 = vmul.f32 %v981, 1.442695
        %v983 = vpow.pop %v982
        %v984 = vsel %vm599, %v983, 0.0
        %985 = vadd.xlane.f32.xlu0 %v984
        %v986 = vpop.xlane.xlu0 %985
        %v987 = vrcp.pop %v986
        %v988 = vmul.f32 %v983, %v987
        %v989 = vpack.c.bf16 %v988, %v988
        %990 = vrot.lane.b32.xlu0 %v598, 104
        %v991 = vpop.permute.xlu0 %990
        %v993 = vsel %vm599, %v989, 0
        %v996 = vsel %vm661, %v991, 0
        %998 = vmatprep.subr.bf16.mxu0 0
        %999 = vmatpush1.bf16.msra.mxu0 0
        %1000 = vmatprep.subr.bf16.mxu0 0
        %1001 = vmatpush1.bf16.msra.mxu0 0
        %1002 = vmatprep.subr.bf16.mxu0 0
        %1003 = vmatpush1.bf16.msra.mxu0 0
        %1004 = vmatprep.subr.bf16.mxu0 0
        %1005 = vmatpush1.bf16.msra.mxu0 0
        %1006 = vmatprep.subr.bf16.mxu0 0
        %1007 = vmatpush1.bf16.msra.mxu0 0
        %1008 = vmatprep.subr.bf16.mxu0 0
        %1009 = vmatpush1.bf16.msra.mxu0 0
        %1010 = vmatprep.subr.bf16.mxu0 0
        %1011 = vmatpush1.bf16.msra.mxu0 0
        %1012 = vmatprep.subr.bf16.mxu0 0
        %1013 = vmatpush1.bf16.msra.mxu0 %v996
        %1014 = vmatprep.subr.bf16.mxu0 0
        %1015 = vmatpush2.bf16.msra.mxu0 0
        %1016 = vmatprep.subr.bf16.mxu0 0
        %1017 = vmatpush2.bf16.msra.mxu0 0
        %1018 = vmatprep.subr.bf16.mxu0 0
        %1019 = vmatpush2.bf16.msra.mxu0 0
        %1020 = vmatprep.subr.bf16.mxu0 0
        %1021 = vmatpush2.bf16.msra.mxu0 0
        %1022 = vmatprep.subr.bf16.mxu0 0
        %1023 = vmatpush2.bf16.msra.mxu0 0
        %1024 = vmatprep.subr.bf16.mxu0 0
        %1025 = vmatpush2.bf16.msra.mxu0 0
        %1026 = vmatprep.subr.bf16.mxu0 0
        %1027 = vmatpush2.bf16.msra.mxu0 0
        %1028 = vmatprep.subr.bf16.mxu0 0
        %1029 = vmatpush2.bf16.msra.mxu0 0
        %1030 = vmatprep.mubr.bf16.mxu0 0
        %1031 = vmatmul.mubr.bf16.gmra.mxu0 %v993
        %v1032 = vpop.f32.mrf.mxu0
        %v1033 = vadd.f32 0.0, %v1032
        %v1034 = vpop.f32.mrf.mxu0
        %v1035 = vpop.f32.mrf.mxu0
        %v1036 = vpop.f32.mrf.mxu0
        %1037 = vdwg.mxu0
        %1039 = vrot.lane.b32.xlu0 %v813, 8
        %v1040 = vpop.permute.xlu0 %1039
        %1043 = vrot.lane.b32.xlu0 %v923, 16
        %v1044 = vpop.permute.xlu0 %1043
        %1047 = vrot.lane.b32.xlu0 %v1033, 24
        %v1048 = vpop.permute.xlu0 %1047
        %v1050 = vsel %vm599, %v700, %v1040
        %vm1051 = vcmask 130048
        %v1052 = vsel %vm1051, %v1050, %v1044
        %vm1053 = vcmask 195584
        %v1054 = vsel %vm1053, %v1052, %v1048
        %v1055 = vpack.c.bf16 %v1054, %v1054
        %v1056 = vld [vmem:[#allocation10] sm:$0xf]
        %v1057 = vld [vmem:[#allocation10 + $0x4] sm:$0xf]
        %v1058 = vld [vmem:[#allocation10 + $0x8] sm:$0xf]
        %v1059 = vld [vmem:[#allocation10 + $0xc] sm:$0xf]
        %v1060 = vld [vmem:[%s6] sm:$0x1]
        %v1062 = vlaneseq
        %v1063 = vshrl.u32 %v1062, 7
        %v1064 = vsub.s32 0, %v1063
        %v1065 = vrot.slane %v1060, %v1064
        %v1071 = vunpack.c.l.b16 %v1056
        %v1072 = vunpack.c.l.b16 %v1057
        %v1073 = vunpack.c.l.b16 %v1058
        %v1074 = vunpack.c.l.b16 %v1059
        %v1075 = vpack.c.b16 %v1072, %v1071
        %v1076 = vpack.c.b16 %v1074, %v1073
        %v1080 = vsel %vm418, %v1055, 0
        %1082 = vmatprep.subr.bf16.mxu0 0
        %1083 = vmatpush1.bf16.msra.mxu0 0
        %1084 = vmatprep.subr.bf16.mxu0 0
        %1085 = vmatpush1.bf16.msra.mxu0 0
        %1086 = vmatprep.subr.bf16.mxu0 0
        %1087 = vmatpush1.bf16.msra.mxu0 0
        %1088 = vmatprep.subr.bf16.mxu0 0
        %1089 = vmatpush1.bf16.msra.mxu0 0
        %1090 = vmatprep.subr.bf16.mxu0 0
        %1091 = vmatpush1.bf16.msra.mxu0 0
        %1092 = vmatprep.subr.bf16.mxu0 0
        %1093 = vmatpush1.bf16.msra.mxu0 0
        %1094 = vmatprep.subr.bf16.mxu0 0
        %1095 = vmatpush1.bf16.msra.mxu0 %v1076
        %1096 = vmatprep.subr.bf16.mxu0 0
        %1097 = vmatpush1.bf16.msra.mxu0 %v1075
        %1098 = vmatprep.subr.bf16.mxu0 0
        %1099 = vmatpush2.bf16.msra.mxu0 0
        %1100 = vmatprep.subr.bf16.mxu0 0
        %1101 = vmatpush2.bf16.msra.mxu0 0
        %1102 = vmatprep.subr.bf16.mxu0 0
        %1103 = vmatpush2.bf16.msra.mxu0 0
        %1104 = vmatprep.subr.bf16.mxu0 0
        %1105 = vmatpush2.bf16.msra.mxu0 0
        %1106 = vmatprep.subr.bf16.mxu0 0
        %1107 = vmatpush2.bf16.msra.mxu0 0
        %1108 = vmatprep.subr.bf16.mxu0 0
        %1109 = vmatpush2.bf16.msra.mxu0 0
        %1110 = vmatprep.subr.bf16.mxu0 0
        %1111 = vmatpush2.bf16.msra.mxu0 0
        %1112 = vmatprep.subr.bf16.mxu0 0
        %1113 = vmatpush2.bf16.msra.mxu0 0
        %1114 = vmatprep.mubr.bf16.mxu0 0
        %1115 = vmatmul.mubr.bf16.gmra.mxu0 %v1080
        %v1116 = vpop.f32.mrf.mxu0
        %v1117 = vadd.f32 %v1065, %v1116
        %v1118 = vpop.f32.mrf.mxu0
        %v1119 = vpop.f32.mrf.mxu0
        %v1120 = vpop.f32.mrf.mxu0
        %1121 = vdwg.mxu0
        %1122 = vst.msk [vmem:[%s393] sm:$0xff] %vm418, %v1117
        %s1123 = sand.u32 %s198, 1
        %s1124 = scalar_lea.sflag [#allocation4], %s1123
        %s1125 = sand.u32 %s198, 1
        %s1126 = smul.addr %s1125, 8
        %s1127 = scalar_lea.vmem [#allocation11], %s1126
        // Predicated region
        $region69: #{tpu_custom_call.1} parent=47 // pred_check
          %p1128 = pneg %p208
        $region70: #{tpu_custom_call.1} parent=47 // pred_check_branch
          %1130 = sbr.rel (%p1128) target = $region72
        $region71: #{tpu_custom_call.1} parent=47 // pred_region
          %s1132 = ssub.s32 128, 128
          %1133 = vsyncadd %s1124, %s1132
          %s1134 = smul.addr %s28, 128
          %s1135 = scalar_lea.hbm %s7, %s1134
          %s1137 = sshll.u32 %s1127, 4
          %s1138 = int_to_ptr.vmem [resolvable:$true] %s1137
          %1140 = dma.vmem_to_hbm [thread:$0]  %s1138, 128, %s1135, %s1124
        $region72: #{tpu_custom_call.1} parent=47 // pred_fallthru
          _
      $region48: #{tpu_custom_call.1} parent=5 // pred_fallthru
        _
      %p1141 = scmp.le.s32.totalorder 2, %s23
      // Predicated region
      $region73: #{tpu_custom_call.1} parent=5 // pred_check
        %p1142 = pneg %p1141
      $region74: #{tpu_custom_call.1} parent=5 // pred_check_branch
        %1144 = sbr.rel (%p1142) target = $region76
      $region75: #{tpu_custom_call.1} parent=5 // pred_region
        %s1145 = ssub.s32 %s23, 2
        // Predicated region
        $region77: #{tpu_custom_call.1} parent=75 // pred_check
          %p1146 = pneg %p214
        $region78: #{tpu_custom_call.1} parent=75 // pred_check_branch
          %1148 = sbr.rel (%p1146) target = $region80
        $region79: #{tpu_custom_call.1} parent=75 // pred_region
          %s1149 = sand.u32 %s199, 1
          %s1150 = scalar_lea.sflag [#allocation4], %s1149
          %s1151 = sand.u32 %s199, 1
          %s1152 = smul.addr %s1151, 8
          %s1153 = scalar_lea.vmem [#allocation11], %s1152
          %1154 = dma.done %s1150, 128
        $region80: #{tpu_custom_call.1} parent=75 // pred_fallthru
          _
      $region76: #{tpu_custom_call.1} parent=5 // pred_fallthru
        _
    $region6: #{tpu_custom_call.1} parent=1 // loop_footer
      %s27 = sadd.s32 1, %s23
    $region7: #{tpu_custom_call.1} parent=1 // loop_footer_branch
      %22 = sbr.rel target = $region3
    $region8: #{tpu_custom_call.1} parent=1 // loop_exit
      _
    %1155 = vsyncpa [#allocation3], 1
    %s1156 = scalar_lea.sflag [#allocation3], 1
    %1157 = vsyncpa %s1156, 1
    %1158 = vsyncpa [#allocation6], 1
    %s1159 = scalar_lea.sflag [#allocation6], 1
    %1160 = vsyncpa %s1159, 1
    %1161 = vsyncpa [#allocation9], 1
    %1162 = vsyncpa [#allocation4], 1
    %s1163 = scalar_lea.sflag [#allocation4], 1
    %1164 = vsyncpa %s1163, 1

// kernel: tpu_custom_call.1
$region0: #{tpu_custom_call.1}
  #allocation0 [shape = 'u32[]', space=smem, size = 0x4, offset = 0x4, fixed_abs, tag = 'smem constant byte address 0x4 - core index']
  #allocation1 [shape = 'u32[144,128]{1,0:T(1,128)}', space=vmem, size = 0x12000, scoped, tag = 'internal scratch']
  %s0 = inlined_call_operand.hbm [shape: f32[2,8,32], index: 0, kind: input, shape index: {}]
  %s1 = inlined_call_operand.hbm [shape: f32[2,8,32], index: 1, kind: input, shape index: {}]
  %s2 = inlined_call_operand.hbm [shape: f32[2,8,32], index: 2, kind: input, shape index: {}]
  %s3 = inlined_call_operand.hbm [shape: bf16[3,32,32], index: 3, kind: input, shape index: {}]
  %s4 = inlined_call_operand.vmem [shape: f32[3,32], index: 4, kind: input, shape index: {}]
  %s5 = inlined_call_operand.hbm [shape: bf16[32,32], index: 5, kind: input, shape index: {}]
  %s6 = inlined_call_operand.vmem [shape: f32[1,32], index: 6, kind: input, shape index: {}]
  %s7 = inlined_call_operand.hbm [shape: f32[2,8,32], index: 7, kind: output, shape index: {}]
  %s8 = sld [smem:[#allocation0]]
  $region81: #{tpu_custom_call.1} parent=0
    _
  %s10 = ssub.s32 1, %s8
  %s11 = scalar_select 0, %s10, %s8
  $region1: #{tpu_custom_call.1} parent=0
    #allocation2 [shape = 'u8[8192]{0}', space=vmem, size = 0x2000, scoped, tag = 'input window, operand 0']
    #allocation3 [shape = 's32[2]{0}', space=sflag, size = 0x8, scoped, tag = 'scoped memory for tpu_custom_call.1']
    #allocation4 [shape = 's32[2]{0}', space=sflag, size = 0x8, scoped, tag = 'scoped memory for tpu_custom_call.1']
    #allocation5 [shape = 'u8[8192]{0}', space=vmem, size = 0x2000, scoped, tag = 'input window, operand 1']
    #allocation6 [shape = 's32[2]{0}', space=sflag, size = 0x8, scoped, tag = 'scoped memory for tpu_custom_call.1']
    #allocation7 [shape = 'u8[8192]{0}', space=vmem, size = 0x2000, scoped, tag = 'input window, operand 2']
    #allocation8 [shape = 'u8[24576]{0}', space=vmem, size = 0x6000, scoped, tag = 'input window, operand 3, single buffered']
    #allocation9 [shape = 's32[1]{0}', space=sflag, size = 0x4, scoped, tag = 'scoped memory for tpu_custom_call.1']
    #allocation10 [shape = 'u8[8192]{0}', space=vmem, size = 0x2000, scoped, tag = 'input window, operand 5, single buffered']
    #allocation11 [shape = 'u8[8192]{0}', space=vmem, size = 0x2000, scoped, tag = 'output window, operand 0']
    %12 = vsyncpa [#allocation3], 0
    %s13 = scalar_lea.sflag [#allocation3], 1
    %14 = vsyncpa %s13, 0
    %15 = vsyncpa [#allocation6], 0
    %s16 = scalar_lea.sflag [#allocation6], 1
    %17 = vsyncpa %s16, 0
    %18 = vsyncpa [#allocation9], 0
    %19 = vsyncpa [#allocation4], 0
    %s20 = scalar_lea.sflag [#allocation4], 1
    %21 = vsyncpa %s20, 0
    loop: start=0, step=1, limit=4
    $region2: #{tpu_custom_call.1} parent=1 // loop_pre_header
      _
    $region3: #{tpu_custom_call.1} parent=1 // loop_header
      %s23 = sphi 0, %s27
      %p24 = scmp.ge.s32.totalorder %s23, 4
      %s33 = sphi 0, %s35
      %s36 = sphi 0, %s33
      %s37 = sphi 0, %s36
      %s53 = sphi 0, %s37
      %s59 = sphi 0, %s61
      %s62 = sphi 0, %s59
      %s63 = sphi 0, %s62
      %s79 = sphi 0, %s63
      %s85 = sphi 0, %s87
      %s88 = sphi 0, %s85
      %s89 = sphi 0, %s88
      %s105 = sphi 0, %s89
      %s109 = sphi 0, %s109
      %s111 = sphi 0, %s109
      %s112 = sphi 0, %s111
      %s126 = sphi 0, %s112
      %s130 = sphi 0, %s130
      %s132 = sphi 0, %s130
      %s133 = sphi 0, %s132
      %s147 = sphi 0, %s133
      %s151 = sphi 0, %s151
      %s153 = sphi 0, %s151
      %s154 = sphi 0, %s153
      %s168 = sphi 0, %s154
      %s172 = sphi 0, %s172
      %s174 = sphi 0, %s172
      %s175 = sphi 0, %s174
      %s189 = sphi 0, %s175
      %s195 = sphi 0, %s197
      %s198 = sphi 0, %s195
      %s199 = sphi 0, %s198
      %s215 = sphi 0, %s199
    $region4: #{tpu_custom_call.1} parent=1 // loop_header_branch
      %26 = sbr.rel (%p24) target = $region8
    $region5: #{tpu_custom_call.1} parent=1 // loop_body
      %s28 = ssub.s32 %s23, 1
      %s29 = ssub.s32 %s23, 2
      %s30 = sadd.s32 %s23, 1
      %s31 = ssub.s32 %s23, %s30
      %p32 = scmp.eq.s32.totalorder %s31, 0
      %s34 = sadd.s32 %s33, 1
      %s35 = scalar_select %p32, %s33, %s34
      %p38 = pneg %p32
      %p39 = scmp.eq.s32.totalorder %s23, 1
      %p40 = por %p38, %p39
      %p41 = scmp.ne.s32.totalorder %s33, %s36
      %p42 = scmp.eq.s32.totalorder %s23, 0
      %p43 = por %p41, %p42
      %p44 = scmp.ne.s32.totalorder %s33, %s36
      %p45 = scmp.eq.s32.totalorder %s28, 1
      %p46 = por %p44, %p45
      %p47 = scmp.ne.s32.totalorder %s36, %s37
      %p48 = scmp.eq.s32.totalorder %s28, 0
      %p49 = por %p47, %p48
      %p50 = scmp.ne.s32.totalorder %s36, %s37
      %p51 = scmp.eq.s32.totalorder %s29, 1
      %p52 = por %p50, %p51
      %p54 = scmp.ne.s32.totalorder %s37, %s53
      %p55 = scmp.eq.s32.totalorder %s29, 0
      %p56 = por %p54, %p55
      %s57 = ssub.s32 %s23, %s30
      %p58 = scmp.eq.s32.totalorder %s57, 0
      %s60 = sadd.s32 %s59, 1
      %s61 = scalar_select %p58, %s59, %s60
      %p64 = pneg %p58
      %p65 = scmp.eq.s32.totalorder %s23, 1
      %p66 = por %p64, %p65
      %p67 = scmp.ne.s32.totalorder %s59, %s62
      %p68 = scmp.eq.s32.totalorder %s23, 0
      %p69 = por %p67, %p68
      %p70 = scmp.ne.s32.totalorder %s59, %s62
      %p71 = scmp.eq.s32.totalorder %s28, 1
      %p72 = por %p70, %p71
      %p73 = scmp.ne.s32.totalorder %s62, %s63
      %p74 = scmp.eq.s32.totalorder %s28, 0
      %p75 = por %p73, %p74
      %p76 = scmp.ne.s32.totalorder %s62, %s63
      %p77 = scmp.eq.s32.totalorder %s29, 1
      %p78 = por %p76, %p77
      %p80 = scmp.ne.s32.totalorder %s63, %s79
      %p81 = scmp.eq.s32.totalorder %s29, 0
      %p82 = por %p80, %p81
      %s83 = ssub.s32 %s23, %s30
      %p84 = scmp.eq.s32.totalorder %s83, 0
      %s86 = sadd.s32 %s85, 1
      %s87 = scalar_select %p84, %s85, %s86
      %p90 = pneg %p84
      %p91 = scmp.eq.s32.totalorder %s23, 1
      %p92 = por %p90, %p91
      %p93 = scmp.ne.s32.totalorder %s85, %s88
      %p94 = scmp.eq.s32.totalorder %s23, 0
      %p95 = por %p93, %p94
      %p96 = scmp.ne.s32.totalorder %s85, %s88
      %p97 = scmp.eq.s32.totalorder %s28, 1
      %p98 = por %p96, %p97
      %p99 = scmp.ne.s32.totalorder %s88, %s89
      %p100 = scmp.eq.s32.totalorder %s28, 0
      %p101 = por %p99, %p100
      %p102 = scmp.ne.s32.totalorder %s88, %s89
      %p103 = scmp.eq.s32.totalorder %s29, 1
      %p104 = por %p102, %p103
      %p106 = scmp.ne.s32.totalorder %s89, %s105
      %p107 = scmp.eq.s32.totalorder %s29, 0
      %p108 = por %p106, %p107
      %s110 = sadd.s32 %s109, 1
      %p113 = scmp.eq.s32.totalorder %s23, 1
      %p114 = scmp.ne.s32.totalorder %s109, %s111
      %p115 = scmp.eq.s32.totalorder %s23, 0
      %p116 = por %p114, %p115
      %p117 = scmp.ne.s32.totalorder %s109, %s111
      %p118 = scmp.eq.s32.totalorder %s28, 1
      %p119 = por %p117, %p118
      %p120 = scmp.ne.s32.totalorder %s111, %s112
      %p121 = scmp.eq.s32.totalorder %s28, 0
      %p122 = por %p120, %p121
      %p123 = scmp.ne.s32.totalorder %s111, %s112
      %p124 = scmp.eq.s32.totalorder %s29, 1
      %p125 = por %p123, %p124
      %p127 = scmp.ne.s32.totalorder %s112, %s126
      %p128 = scmp.eq.s32.totalorder %s29, 0
      %p129 = por %p127, %p128
      %s131 = sadd.s32 %s130, 1
      %p134 = scmp.eq.s32.totalorder %s23, 1
      %p135 = scmp.ne.s32.totalorder %s130, %s132
      %p136 = scmp.eq.s32.totalorder %s23, 0
      %p137 = por %p135, %p136
      %p138 = scmp.ne.s32.totalorder %s130, %s132
      %p139 = scmp.eq.s32.totalorder %s28, 1
      %p140 = por %p138, %p139
      %p141 = scmp.ne.s32.totalorder %s132, %s133
      %p142 = scmp.eq.s32.totalorder %s28, 0
      %p143 = por %p141, %p142
      %p144 = scmp.ne.s32.totalorder %s132, %s133
      %p145 = scmp.eq.s32.totalorder %s29, 1
      %p146 = por %p144, %p145
      %p148 = scmp.ne.s32.totalorder %s133, %s147
      %p149 = scmp.eq.s32.totalorder %s29, 0
      %p150 = por %p148, %p149
      %s152 = sadd.s32 %s151, 1
      %p155 = scmp.eq.s32.totalorder %s23, 1
      %p156 = scmp.ne.s32.totalorder %s151, %s153
      %p157 = scmp.eq.s32.totalorder %s23, 0
      %p158 = por %p156, %p157
      %p159 = scmp.ne.s32.totalorder %s151, %s153
      %p160 = scmp.eq.s32.totalorder %s28, 1
      %p161 = por %p159, %p160
      %p162 = scmp.ne.s32.totalorder %s153, %s154
      %p163 = scmp.eq.s32.totalorder %s28, 0
      %p164 = por %p162, %p163
      %p165 = scmp.ne.s32.totalorder %s153, %s154
      %p166 = scmp.eq.s32.totalorder %s29, 1
      %p167 = por %p165, %p166
      %p169 = scmp.ne.s32.totalorder %s154, %s168
      %p170 = scmp.eq.s32.totalorder %s29, 0
      %p171 = por %p169, %p170
      %s173 = sadd.s32 %s172, 1
      %p176 = scmp.eq.s32.totalorder %s23, 1
      %p177 = scmp.ne.s32.totalorder %s172, %s174
      %p178 = scmp.eq.s32.totalorder %s23, 0
      %p179 = por %p177, %p178
      %p180 = scmp.ne.s32.totalorder %s172, %s174
      %p181 = scmp.eq.s32.totalorder %s28, 1
      %p182 = por %p180, %p181
      %p183 = scmp.ne.s32.totalorder %s174, %s175
      %p184 = scmp.eq.s32.totalorder %s28, 0
      %p185 = por %p183, %p184
      %p186 = scmp.ne.s32.totalorder %s174, %s175
      %p187 = scmp.eq.s32.totalorder %s29, 1
      %p188 = por %p186, %p187
      %p190 = scmp.ne.s32.totalorder %s175, %s189
      %p191 = scmp.eq.s32.totalorder %s29, 0
      %p192 = por %p190, %p191
      %s193 = ssub.s32 %s23, %s30
      %p194 = scmp.eq.s32.totalorder %s193, 0
      %s196 = sadd.s32 %s195, 1
      %s197 = scalar_select %p194, %s195, %s196
      %p200 = pneg %p194
      %p201 = scmp.eq.s32.totalorder %s23, 1
      %p202 = por %p200, %p201
      %p203 = scmp.ne.s32.totalorder %s195, %s198
      %p204 = scmp.eq.s32.totalorder %s23, 0
      %p205 = por %p203, %p204
      %p206 = scmp.ne.s32.totalorder %s195, %s198
      %p207 = scmp.eq.s32.totalorder %s28, 1
      %p208 = por %p206, %p207
      %p209 = scmp.ne.s32.totalorder %s198, %s199
      %p210 = scmp.eq.s32.totalorder %s28, 0
      %p211 = por %p209, %p210
      %p212 = scmp.ne.s32.totalorder %s198, %s199
      %p213 = scmp.eq.s32.totalorder %s29, 1
      %p214 = por %p212, %p213
      %p216 = scmp.ne.s32.totalorder %s199, %s215
      %p217 = scmp.eq.s32.totalorder %s29, 0
      %p218 = por %p216, %p217
      %p219 = scmp.le.s32.totalorder 1, %s23
      %p220 = scmp.lt.s32.totalorder %s23, 3
      %p221 = pnand %p219, %p220
      %p222 = pneg %p221
      // Predicated region
      $region9: #{tpu_custom_call.1} parent=5 // pred_check
        _
      $region10: #{tpu_custom_call.1} parent=5 // pred_check_branch
        %224 = sbr.rel (%p221) target = $region12
      $region11: #{tpu_custom_call.1} parent=5 // pred_region
        %s225 = ssub.s32 %s23, 1
        // Predicated region
        $region13: #{tpu_custom_call.1} parent=11 // pred_check
          %p226 = pneg %p122
        $region14: #{tpu_custom_call.1} parent=11 // pred_check_branch
          %228 = sbr.rel (%p226) target = $region16
        $region15: #{tpu_custom_call.1} parent=11 // pred_region
          %s230 = ssub.s32 768, 768
          %231 = vsyncadd [#allocation9], %s230
          %s232 = sshll.u32 [#allocation8], 4
          %s233 = int_to_ptr.vmem [resolvable:$true] %s232
          %238 = dma.hbm_to_vmem [thread:$0]  %s3, 768, %s233, [#allocation9], 64, 64, 4
        $region16: #{tpu_custom_call.1} parent=11 // pred_fallthru
          _
        // Predicated region
        $region17: #{tpu_custom_call.1} parent=11 // pred_check
          %p239 = pneg %p143
        $region18: #{tpu_custom_call.1} parent=11 // pred_check_branch
          %241 = sbr.rel (%p239) target = $region20
        $region19: #{tpu_custom_call.1} parent=11 // pred_region
          _
        $region20: #{tpu_custom_call.1} parent=11 // pred_fallthru
          _
        // Predicated region
        $region21: #{tpu_custom_call.1} parent=11 // pred_check
          %p242 = pneg %p164
        $region22: #{tpu_custom_call.1} parent=11 // pred_check_branch
          %244 = sbr.rel (%p242) target = $region24
        $region23: #{tpu_custom_call.1} parent=11 // pred_region
          %s246 = ssub.s32 256, 256
          %247 = vsyncadd [#allocation9], %s246
          %s248 = sshll.u32 [#allocation10], 4
          %s249 = int_to_ptr.vmem [resolvable:$true] %s248
          %254 = dma.hbm_to_vmem [thread:$0]  %s5, 256, %s249, [#allocation9], 64, 64, 4
        $region24: #{tpu_custom_call.1} parent=11 // pred_fallthru
          _
        // Predicated region
        $region25: #{tpu_custom_call.1} parent=11 // pred_check
          %p255 = pneg %p185
        $region26: #{tpu_custom_call.1} parent=11 // pred_check_branch
          %257 = sbr.rel (%p255) target = $region28
        $region27: #{tpu_custom_call.1} parent=11 // pred_region
          _
        $region28: #{tpu_custom_call.1} parent=11 // pred_fallthru
          _
      $region12: #{tpu_custom_call.1} parent=5 // pred_fallthru
        _
      %p258 = scmp.lt.s32.totalorder %s23, 2
      // Predicated region
      $region29: #{tpu_custom_call.1} parent=5 // pred_check
        %p259 = pneg %p258
      $region30: #{tpu_custom_call.1} parent=5 // pred_check_branch
        %261 = sbr.rel (%p259) target = $region32
      $region31: #{tpu_custom_call.1} parent=5 // pred_region
        // Predicated region
        $region33: #{tpu_custom_call.1} parent=31 // pred_check
          %p262 = pneg %p43
        $region34: #{tpu_custom_call.1} parent=31 // pred_check_branch
          %264 = sbr.rel (%p262) target = $region36
        $region35: #{tpu_custom_call.1} parent=31 // pred_region
          %s265 = sand.u32 %s33, 1
          %s266 = scalar_lea.sflag [#allocation3], %s265
          %s267 = sand.u32 %s33, 1
          %s268 = smul.addr %s267, 8
          %s269 = scalar_lea.vmem [#allocation2], %s268
          %s271 = ssub.s32 128, 128
          %272 = vsyncadd %s266, %s271
          %s273 = smul.addr %s23, 128
          %s274 = scalar_lea.hbm %s0, %s273
          %s276 = sshll.u32 %s269, 4
          %s277 = int_to_ptr.vmem [resolvable:$true] %s276
          %279 = dma.hbm_to_vmem [thread:$0]  %s274, 128, %s277, %s266
        $region36: #{tpu_custom_call.1} parent=31 // pred_fallthru
          _
        // Predicated region
        $region37: #{tpu_custom_call.1} parent=31 // pred_check
          %p280 = pneg %p69
        $region38: #{tpu_custom_call.1} parent=31 // pred_check_branch
          %282 = sbr.rel (%p280) target = $region40
        $region39: #{tpu_custom_call.1} parent=31 // pred_region
          %s283 = sand.u32 %s23, 1
          %s284 = scalar_lea.sflag [#allocation6], %s283
          %s285 = sand.u32 %s59, 1
          %s286 = smul.addr %s285, 8
          %s287 = scalar_lea.vmem [#allocation5], %s286
          %s289 = ssub.s32 128, 128
          %290 = vsyncadd %s284, %s289
          %s291 = smul.addr %s23, 128
          %s292 = scalar_lea.hbm %s1, %s291
          %s294 = sshll.u32 %s287, 4
          %s295 = int_to_ptr.vmem [resolvable:$true] %s294
          %297 = dma.hbm_to_vmem [thread:$0]  %s292, 128, %s295, %s284
        $region40: #{tpu_custom_call.1} parent=31 // pred_fallthru
          _
        // Predicated region
        $region41: #{tpu_custom_call.1} parent=31 // pred_check
          %p298 = pneg %p95
        $region42: #{tpu_custom_call.1} parent=31 // pred_check_branch
          %300 = sbr.rel (%p298) target = $region44
        $region43: #{tpu_custom_call.1} parent=31 // pred_region
          %s301 = sand.u32 %s23, 1
          %s302 = scalar_lea.sflag [#allocation6], %s301
          %s303 = sand.u32 %s85, 1
          %s304 = smul.addr %s303, 8
          %s305 = scalar_lea.vmem [#allocation7], %s304
          %s307 = ssub.s32 128, 128
          %308 = vsyncadd %s302, %s307
          %s309 = smul.addr %s23, 128
          %s310 = scalar_lea.hbm %s2, %s309
          %s312 = sshll.u32 %s305, 4
          %s313 = int_to_ptr.vmem [resolvable:$true] %s312
          %315 = dma.hbm_to_vmem [thread:$0]  %s310, 128, %s313, %s302
        $region44: #{tpu_custom_call.1} parent=31 // pred_fallthru
          _
      $region32: #{tpu_custom_call.1} parent=5 // pred_fallthru
        _
      %p316 = scmp.le.s32.totalorder 1, %s23
      %p317 = scmp.lt.s32.totalorder %s23, 3
      %p318 = pnand %p316, %p317
      %p319 = pneg %p318
      // Predicated region
      $region45: #{tpu_custom_call.1} parent=5 // pred_check
        _
      $region46: #{tpu_custom_call.1} parent=5 // pred_check_branch
        %321 = sbr.rel (%p318) target = $region48
      $region47: #{tpu_custom_call.1} parent=5 // pred_region
        %s322 = ssub.s32 %s23, 1
        %s323 = sand.u32 %s36, 1
        %s324 = scalar_lea.sflag [#allocation3], %s323
        %s325 = sand.u32 %s36, 1
        %s326 = smul.addr %s325, 8
        %s327 = scalar_lea.vmem [#allocation2], %s326
        // Predicated region
        $region49: #{tpu_custom_call.1} parent=47 // pred_check
          %p328 = pneg %p49
        $region50: #{tpu_custom_call.1} parent=47 // pred_check_branch
          %330 = sbr.rel (%p328) target = $region52
        $region51: #{tpu_custom_call.1} parent=47 // pred_region
          %331 = dma.done %s324, 128
        $region52: #{tpu_custom_call.1} parent=47 // pred_fallthru
          _
        %s332 = sand.u32 %s28, 1
        %s333 = scalar_lea.sflag [#allocation6], %s332
        %s334 = sand.u32 %s62, 1
        %s335 = smul.addr %s334, 8
        %s336 = scalar_lea.vmem [#allocation5], %s335
        // Predicated region
        $region53: #{tpu_custom_call.1} parent=47 // pred_check
          %p337 = pneg %p75
        $region54: #{tpu_custom_call.1} parent=47 // pred_check_branch
          %339 = sbr.rel (%p337) target = $region56
        $region55: #{tpu_custom_call.1} parent=47 // pred_region
          %340 = dma.done %s333, 128
        $region56: #{tpu_custom_call.1} parent=47 // pred_fallthru
          _
        %s341 = sand.u32 %s28, 1
        %s342 = scalar_lea.sflag [#allocation6], %s341
        %s343 = sand.u32 %s88, 1
        %s344 = smul.addr %s343, 8
        %s345 = scalar_lea.vmem [#allocation7], %s344
        // Predicated region
        $region57: #{tpu_custom_call.1} parent=47 // pred_check
          %p346 = pneg %p101
        $region58: #{tpu_custom_call.1} parent=47 // pred_check_branch
          %348 = sbr.rel (%p346) target = $region60
        $region59: #{tpu_custom_call.1} parent=47 // pred_region
          %349 = dma.done %s342, 128
        $region60: #{tpu_custom_call.1} parent=47 // pred_fallthru
          _
        // Predicated region
        $region61: #{tpu_custom_call.1} parent=47 // pred_check
          %p350 = pneg %p122
        $region62: #{tpu_custom_call.1} parent=47 // pred_check_branch
          %352 = sbr.rel (%p350) target = $region64
        $region63: #{tpu_custom_call.1} parent=47 // pred_region
          %353 = dma.done [#allocation9], 768
        $region64: #{tpu_custom_call.1} parent=47 // pred_fallthru
          _
        // Predicated region
        $region65: #{tpu_custom_call.1} parent=47 // pred_check
          %p354 = pneg %p164
        $region66: #{tpu_custom_call.1} parent=47 // pred_check_branch
          %356 = sbr.rel (%p354) target = $region68
        $region67: #{tpu_custom_call.1} parent=47 // pred_region
          %357 = dma.done [#allocation9], 256
        $region68: #{tpu_custom_call.1} parent=47 // pred_fallthru
          _
        %s358 = sand.u32 %s36, 1
        %s359 = scalar_lea.sflag [#allocation3], %s358
        %s360 = sand.u32 %s36, 1
        %s361 = smul.addr %s360, 8
        %s362 = scalar_lea.vmem [#allocation2], %s361
        %p363 = pneg %p49
        %p364 = pneg %p46
        %s365 = sand.u32 %s28, 1
        %s366 = scalar_lea.sflag [#allocation6], %s365
        %s367 = sand.u32 %s62, 1
        %s368 = smul.addr %s367, 8
        %s369 = scalar_lea.vmem [#allocation5], %s368
        %p370 = pneg %p75
        %p371 = pneg %p72
        %s372 = sand.u32 %s28, 1
        %s373 = scalar_lea.sflag [#allocation6], %s372
        %s374 = sand.u32 %s88, 1
        %s375 = smul.addr %s374, 8
        %s376 = scalar_lea.vmem [#allocation7], %s375
        %p377 = pneg %p101
        %p378 = pneg %p98
        %p379 = pneg %p122
        %p380 = pneg %p119
        %p381 = pneg %p143
        %p382 = pneg %p140
        %p383 = pneg %p164
        %p384 = pneg %p161
        %p385 = pneg %p185
        %p386 = pneg %p182
        %p387 = pneg %p211
        %p388 = pneg %p208
        %s389 = sand.u32 %s198, 1
        %s390 = scalar_lea.sflag [#allocation4], %s389
        %s391 = sand.u32 %s198, 1
        %s392 = smul.addr %s391, 8
        %s393 = scalar_lea.vmem [#allocation11], %s392
        %v395 = vld [vmem:[%s327] sm:$0xff]
        %v396 = vpack.c.bf16 %v395, %v395
        %v397 = vld [vmem:[#allocation8] sm:$0xf]
        %v398 = vld [vmem:[#allocation8 + $0x4] sm:$0xf]
        %v399 = vld [vmem:[#allocation8 + $0x8] sm:$0xf]
        %v400 = vld [vmem:[#allocation8 + $0xc] sm:$0xf]
        %v401 = vld [vmem:[%s4] sm:$0x1]
        %v402 = vlaneseq
        %v403 = vshrl.u32 %v402, 7
        %v404 = vsub.s32 0, %v403
        %v405 = vrot.slane %v401, %v404
        %v410 = vunpack.c.l.b16 %v397
        %v411 = vunpack.c.l.b16 %v398
        %v412 = vunpack.c.l.b16 %v399
        %v413 = vunpack.c.l.b16 %v400
        %v414 = vpack.c.b16 %v411, %v410
        %v415 = vpack.c.b16 %v413, %v412
        %vm418 = vcmask 261120
        %v420 = vsel %vm418, %v396, 0
        %422 = vmatprep.subr.bf16.mxu0 0
        %423 = vmatpush1.bf16.msra.mxu0 0
        %424 = vmatprep.subr.bf16.mxu0 0
        %425 = vmatpush1.bf16.msra.mxu0 0
        %426 = vmatprep.subr.bf16.mxu0 0
        %427 = vmatpush1.bf16.msra.mxu0 0
        %428 = vmatprep.subr.bf16.mxu0 0
        %429 = vmatpush1.bf16.msra.mxu0 0
        %430 = vmatprep.subr.bf16.mxu0 0
        %431 = vmatpush1.bf16.msra.mxu0 0
        %432 = vmatprep.subr.bf16.mxu0 0
        %433 = vmatpush1.bf16.msra.mxu0 0
        %434 = vmatprep.subr.bf16.mxu0 0
        %435 = vmatpush1.bf16.msra.mxu0 %v415
        %436 = vmatprep.subr.bf16.mxu0 0
        %437 = vmatpush1.bf16.msra.mxu0 %v414
        %438 = vmatprep.subr.bf16.mxu0 0
        %439 = vmatpush2.bf16.msra.mxu0 0
        %440 = vmatprep.subr.bf16.mxu0 0
        %441 = vmatpush2.bf16.msra.mxu0 0
        %442 = vmatprep.subr.bf16.mxu0 0
        %443 = vmatpush2.bf16.msra.mxu0 0
        %444 = vmatprep.subr.bf16.mxu0 0
        %445 = vmatpush2.bf16.msra.mxu0 0
        %446 = vmatprep.subr.bf16.mxu0 0
        %447 = vmatpush2.bf16.msra.mxu0 0
        %448 = vmatprep.subr.bf16.mxu0 0
        %449 = vmatpush2.bf16.msra.mxu0 0
        %450 = vmatprep.subr.bf16.mxu0 0
        %451 = vmatpush2.bf16.msra.mxu0 0
        %452 = vmatprep.subr.bf16.mxu0 0
        %453 = vmatpush2.bf16.msra.mxu0 0
        %454 = vmatprep.mubr.bf16.mxu0 0
        %455 = vmatmul.mubr.bf16.gmra.mxu0 %v420
        %v456 = vpop.f32.mrf.mxu0
        %v457 = vadd.f32 %v405, %v456
        %v458 = vpop.f32.mrf.mxu0
        %v459 = vpop.f32.mrf.mxu0
        %v460 = vpop.f32.mrf.mxu0
        %461 = vdwg.mxu0
        %v462 = vld [vmem:[%s336] sm:$0xff]
        %v463 = vpack.c.bf16 %v462, %v462
        %s464 = scalar_lea.vmem [#allocation8], 16
        %v465 = vld [vmem:[%s464] sm:$0xf]
        %v466 = vld [vmem:[%s464 + $0x4] sm:$0xf]
        %v467 = vld [vmem:[%s464 + $0x8] sm:$0xf]
        %v468 = vld [vmem:[%s464 + $0xc] sm:$0xf]
        %v469 = vld [vmem:[%s4 + $0x1] sm:$0x1]
        %v470 = vlaneseq
        %v471 = vshrl.u32 %v470, 7
        %v472 = vsub.s32 0, %v471
        %v473 = vrot.slane %v469, %v472
        %v478 = vunpack.c.l.b16 %v465
        %v479 = vunpack.c.l.b16 %v466
        %v480 = vunpack.c.l.b16 %v467
        %v481 = vunpack.c.l.b16 %v468
        %v482 = vpack.c.b16 %v479, %v478
        %v483 = vpack.c.b16 %v481, %v480
        %v487 = vsel %vm418, %v463, 0
        %489 = vmatprep.subr.bf16.mxu0 0
        %490 = vmatpush1.bf16.msra.mxu0 0
        %491 = vmatprep.subr.bf16.mxu0 0
        %492 = vmatpush1.bf16.msra.mxu0 0
        %493 = vmatprep.subr.bf16.mxu0 0
        %494 = vmatpush1.bf16.msra.mxu0 0
        %495 = vmatprep.subr.bf16.mxu0 0
        %496 = vmatpush1.bf16.msra.mxu0 0
        %497 = vmatprep.subr.bf16.mxu0 0
        %498 = vmatpush1.bf16.msra.mxu0 0
        %499 = vmatprep.subr.bf16.mxu0 0
        %500 = vmatpush1.bf16.msra.mxu0 0
        %501 = vmatprep.subr.bf16.mxu0 0
        %502 = vmatpush1.bf16.msra.mxu0 %v483
        %503 = vmatprep.subr.bf16.mxu0 0
        %504 = vmatpush1.bf16.msra.mxu0 %v482
        %505 = vmatprep.subr.bf16.mxu0 0
        %506 = vmatpush2.bf16.msra.mxu0 0
        %507 = vmatprep.subr.bf16.mxu0 0
        %508 = vmatpush2.bf16.msra.mxu0 0
        %509 = vmatprep.subr.bf16.mxu0 0
        %510 = vmatpush2.bf16.msra.mxu0 0
        %511 = vmatprep.subr.bf16.mxu0 0
        %512 = vmatpush2.bf16.msra.mxu0 0
        %513 = vmatprep.subr.bf16.mxu0 0
        %514 = vmatpush2.bf16.msra.mxu0 0
        %515 = vmatprep.subr.bf16.mxu0 0
        %516 = vmatpush2.bf16.msra.mxu0 0
        %517 = vmatprep.subr.bf16.mxu0 0
        %518 = vmatpush2.bf16.msra.mxu0 0
        %519 = vmatprep.subr.bf16.mxu0 0
        %520 = vmatpush2.bf16.msra.mxu0 0
        %521 = vmatprep.mubr.bf16.mxu0 0
        %522 = vmatmul.mubr.bf16.gmra.mxu0 %v487
        %v523 = vpop.f32.mrf.mxu0
        %v524 = vadd.f32 %v473, %v523
        %v525 = vpop.f32.mrf.mxu0
        %v526 = vpop.f32.mrf.mxu0
        %v527 = vpop.f32.mrf.mxu0
        %528 = vdwg.mxu0
        %v529 = vld [vmem:[%s345] sm:$0xff]
        %v530 = vpack.c.bf16 %v529, %v529
        %s531 = scalar_lea.vmem [#allocation8], 32
        %v532 = vld [vmem:[%s531] sm:$0xf]
        %v533 = vld [vmem:[%s531 + $0x4] sm:$0xf]
        %v534 = vld [vmem:[%s531 + $0x8] sm:$0xf]
        %v535 = vld [vmem:[%s531 + $0xc] sm:$0xf]
        %v536 = vld [vmem:[%s4 + $0x2] sm:$0x1]
        %v537 = vlaneseq
        %v538 = vshrl.u32 %v537, 7
        %v539 = vsub.s32 0, %v538
        %v540 = vrot.slane %v536, %v539
        %v545 = vunpack.c.l.b16 %v532
        %v546 = vunpack.c.l.b16 %v533
        %v547 = vunpack.c.l.b16 %v534
        %v548 = vunpack.c.l.b16 %v535
        %v549 = vpack.c.b16 %v546, %v545
        %v550 = vpack.c.b16 %v548, %v547
        %v554 = vsel %vm418, %v530, 0
        %556 = vmatprep.subr.bf16.mxu0 0
        %557 = vmatpush1.bf16.msra.mxu0 0
        %558 = vmatprep.subr.bf16.mxu0 0
        %559 = vmatpush1.bf16.msra.mxu0 0
        %560 = vmatprep.subr.bf16.mxu0 0
        %561 = vmatpush1.bf16.msra.mxu0 0
        %562 = vmatprep.subr.bf16.mxu0 0
        %563 = vmatpush1.bf16.msra.mxu0 0
        %564 = vmatprep.subr.bf16.mxu0 0
        %565 = vmatpush1.bf16.msra.mxu0 0
        %566 = vmatprep.subr.bf16.mxu0 0
        %567 = vmatpush1.bf16.msra.mxu0 0
        %568 = vmatprep.subr.bf16.mxu0 0
        %569 = vmatpush1.bf16.msra.mxu0 %v550
        %570 = vmatprep.subr.bf16.mxu0 0
        %571 = vmatpush1.bf16.msra.mxu0 %v549
        %572 = vmatprep.subr.bf16.mxu0 0
        %573 = vmatpush2.bf16.msra.mxu0 0
        %574 = vmatprep.subr.bf16.mxu0 0
        %575 = vmatpush2.bf16.msra.mxu0 0
        %576 = vmatprep.subr.bf16.mxu0 0
        %577 = vmatpush2.bf16.msra.mxu0 0
        %578 = vmatprep.subr.bf16.mxu0 0
        %579 = vmatpush2.bf16.msra.mxu0 0
        %580 = vmatprep.subr.bf16.mxu0 0
        %581 = vmatpush2.bf16.msra.mxu0 0
        %582 = vmatprep.subr.bf16.mxu0 0
        %583 = vmatpush2.bf16.msra.mxu0 0
        %584 = vmatprep.subr.bf16.mxu0 0
        %585 = vmatpush2.bf16.msra.mxu0 0
        %586 = vmatprep.subr.bf16.mxu0 0
        %587 = vmatpush2.bf16.msra.mxu0 0
        %588 = vmatprep.mubr.bf16.mxu0 0
        %589 = vmatmul.mubr.bf16.gmra.mxu0 %v554
        %v590 = vpop.f32.mrf.mxu0
        %v591 = vadd.f32 %v540, %v590
        %v592 = vpop.f32.mrf.mxu0
        %v593 = vpop.f32.mrf.mxu0
        %v594 = vpop.f32.mrf.mxu0
        %595 = vdwg.mxu0
        %v596 = vpack.c.bf16 %v457, %v457
        %v597 = vpack.c.bf16 %v524, %v524
        %v598 = vpack.c.bf16 %v591, %v591
        %vm599 = vcmask 64512
        %v601 = vsel %vm599, %v596, 0
        %v604 = vsel %vm599, %v597, 0
        %606 = vmatprep.subr.bf16.mxu0 0
        %607 = vmatpush1.bf16.xpose.msra.mxu0 0
        %608 = vmatprep.subr.bf16.mxu0 0
        %609 = vmatpush1.bf16.xpose.msra.mxu0 0
        %610 = vmatprep.subr.bf16.mxu0 0
        %611 = vmatpush1.bf16.xpose.msra.mxu0 0
        %612 = vmatprep.subr.bf16.mxu0 0
        %613 = vmatpush1.bf16.xpose.msra.mxu0 0
        %614 = vmatprep.subr.bf16.mxu0 0
        %615 = vmatpush1.bf16.xpose.msra.mxu0 0
        %616 = vmatprep.subr.bf16.mxu0 0
        %617 = vmatpush1.bf16.xpose.msra.mxu0 0
        %618 = vmatprep.subr.bf16.mxu0 0
        %619 = vmatpush1.bf16.xpose.msra.mxu0 0
        %620 = vmatprep.subr.bf16.mxu0 0
        %621 = vmatpush1.bf16.xpose.msra.mxu0 %v604
        %622 = vmatprep.subr.bf16.mxu0 0
        %623 = vmatpush2.bf16.xpose.msra.mxu0 0
        %624 = vmatprep.subr.bf16.mxu0 0
        %625 = vmatpush2.bf16.xpose.msra.mxu0 0
        %626 = vmatprep.subr.bf16.mxu0 0
        %627 = vmatpush2.bf16.xpose.msra.mxu0 0
        %628 = vmatprep.subr.bf16.mxu0 0
        %629 = vmatpush2.bf16.xpose.msra.mxu0 0
        %630 = vmatprep.subr.bf16.mxu0 0
        %631 = vmatpush2.bf16.xpose.msra.mxu0 0
        %632 = vmatprep.subr.bf16.mxu0 0
        %633 = vmatpush2.bf16.xpose.msra.mxu0 0
        %634 = vmatprep.subr.bf16.mxu0 0
        %635 = vmatpush2.bf16.xpose.msra.mxu0 0
        %636 = vmatprep.subr.bf16.mxu0 0
        %637 = vmatpush2.bf16.xpose.msra.mxu0 0
        %638 = vmatprep.mubr.bf16.mxu0 0
        %639 = vmatmul.mubr.bf16.gmra.mxu0 %v601
        %v640 = vpop.f32.mrf.mxu0
        %v641 = vadd.f32 0.0, %v640
        %v642 = vpop.f32.mrf.mxu0
        %v643 = vpop.f32.mrf.mxu0
        %v644 = vpop.f32.mrf.mxu0
        %645 = vdwg.mxu0
        %v646 = vsel %vm599, %v641, -inf
        %647 = vmax.xlane.f32.xlu0 %v646
        %v648 = vpop.xlane.xlu0 %647
        %v649 = vsub.f32 %v641, %v648
        %v650 = vmul.f32 %v649, 1.442695
        %v651 = vpow.pop %v650
        %v652 = vsel %vm599, %v651, 0.0
        %653 = vadd.xlane.f32.xlu0 %v652
        %v654 = vpop.xlane.xlu0 %653
        %v655 = vrcp.pop %v654
        %v656 = vmul.f32 %v651, %v655
        %v657 = vpack.c.bf16 %v656, %v656
        %v659 = vsel %vm599, %v657, 0
        %vm661 = vcmask 1043456
        %v663 = vsel %vm661, %v598, 0
        %665 = vmatprep.subr.bf16.mxu0 0
        %666 = vmatpush1.bf16.msra.mxu0 0
        %667 = vmatprep.subr.bf16.mxu0 0
        %668 = vmatpush1.bf16.msra.mxu0 0
        %669 = vmatprep.subr.bf16.mxu0 0
        %670 = vmatpush1.bf16.msra.mxu0 0
        %671 = vmatprep.subr.bf16.mxu0 0
        %672 = vmatpush1.bf16.msra.mxu0 0
        %673 = vmatprep.subr.bf16.mxu0 0
        %674 = vmatpush1.bf16.msra.mxu0 0
        %675 = vmatprep.subr.bf16.mxu0 0
        %676 = vmatpush1.bf16.msra.mxu0 0
        %677 = vmatprep.subr.bf16.mxu0 0
        %678 = vmatpush1.bf16.msra.mxu0 0
        %679 = vmatprep.subr.bf16.mxu0 0
        %680 = vmatpush1.bf16.msra.mxu0 %v663
        %681 = vmatprep.subr.bf16.mxu0 0
        %682 = vmatpush2.bf16.msra.mxu0 0
        %683 = vmatprep.subr.bf16.mxu0 0
        %684 = vmatpush2.bf16.msra.mxu0 0
        %685 = vmatprep.subr.bf16.mxu0 0
        %686 = vmatpush2.bf16.msra.mxu0 0
        %687 = vmatprep.subr.bf16.mxu0 0
        %688 = vmatpush2.bf16.msra.mxu0 0
        %689 = vmatprep.subr.bf16.mxu0 0
        %690 = vmatpush2.bf16.msra.mxu0 0
        %691 = vmatprep.subr.bf16.mxu0 0
        %692 = vmatpush2.bf16.msra.mxu0 0
        %693 = vmatprep.subr.bf16.mxu0 0
        %694 = vmatpush2.bf16.msra.mxu0 0
        %695 = vmatprep.subr.bf16.mxu0 0
        %696 = vmatpush2.bf16.msra.mxu0 0
        %697 = vmatprep.mubr.bf16.mxu0 0
        %698 = vmatmul.mubr.bf16.gmra.mxu0 %v659
        %v699 = vpop.f32.mrf.mxu0
        %v700 = vadd.f32 0.0, %v699
        %v701 = vpop.f32.mrf.mxu0
        %v702 = vpop.f32.mrf.mxu0
        %v703 = vpop.f32.mrf.mxu0
        %704 = vdwg.mxu0
        %706 = vrot.lane.b32.xlu0 %v596, 120
        %v707 = vpop.permute.xlu0 %706
        %709 = vrot.lane.b32.xlu0 %v597, 120
        %v710 = vpop.permute.xlu0 %709
        %v712 = vsel %vm599, %v707, 0
        %v715 = vsel %vm599, %v710, 0
        %717 = vmatprep.subr.bf16.mxu0 0
        %718 = vmatpush1.bf16.xpose.msra.mxu0 0
        %719 = vmatprep.subr.bf16.mxu0 0
        %720 = vmatpush1.bf16.xpose.msra.mxu0 0
        %721 = vmatprep.subr.bf16.mxu0 0
        %722 = vmatpush1.bf16.xpose.msra.mxu0 0
        %723 = vmatprep.subr.bf16.mxu0 0
        %724 = vmatpush1.bf16.xpose.msra.mxu0 0
        %725 = vmatprep.subr.bf16.mxu0 0
        %726 = vmatpush1.bf16.xpose.msra.mxu0 0
        %727 = vmatprep.subr.bf16.mxu0 0
        %728 = vmatpush1.bf16.xpose.msra.mxu0 0
        %729 = vmatprep.subr.bf16.mxu0 0
        %730 = vmatpush1.bf16.xpose.msra.mxu0 0
        %731 = vmatprep.subr.bf16.mxu0 0
        %732 = vmatpush1.bf16.xpose.msra.mxu0 %v715
        %733 = vmatprep.subr.bf16.mxu0 0
        %734 = vmatpush2.bf16.xpose.msra.mxu0 0
        %735 = vmatprep.subr.bf16.mxu0 0
        %736 = vmatpush2.bf16.xpose.msra.mxu0 0
        %737 = vmatprep.subr.bf16.mxu0 0
        %738 = vmatpush2.bf16.xpose.msra.mxu0 0
        %739 = vmatprep.subr.bf16.mxu0 0
        %740 = vmatpush2.bf16.xpose.msra.mxu0 0
        %741 = vmatprep.subr.bf16.mxu0 0
        %742 = vmatpush2.bf16.xpose.msra.mxu0 0
        %743 = vmatprep.subr.bf16.mxu0 0
        %744 = vmatpush2.bf16.xpose.msra.mxu0 0
        %745 = vmatprep.subr.bf16.mxu0 0
        %746 = vmatpush2.bf16.xpose.msra.mxu0 0
        %747 = vmatprep.subr.bf16.mxu0 0
        %748 = vmatpush2.bf16.xpose.msra.mxu0 0
        %749 = vmatprep.mubr.bf16.mxu0 0
        %750 = vmatmul.mubr.bf16.gmra.mxu0 %v712
        %v751 = vpop.f32.mrf.mxu0
        %v752 = vadd.f32 0.0, %v751
        %v753 = vpop.f32.mrf.mxu0
        %v754 = vpop.f32.mrf.mxu0
        %v755 = vpop.f32.mrf.mxu0
        %756 = vdwg.mxu0
        %v757 = vsel %vm599, %v752, -inf
        %758 = vmax.xlane.f32.xlu0 %v757
        %v759 = vpop.xlane.xlu0 %758
        %v760 = vsub.f32 %v752, %v759
        %v761 = vmul.f32 %v760, 1.442695
        %v762 = vpow.pop %v761
        %v763 = vsel %vm599, %v762, 0.0
        %764 = vadd.xlane.f32.xlu0 %v763
        %v765 = vpop.xlane.xlu0 %764
        %v766 = vrcp.pop %v765
        %v767 = vmul.f32 %v762, %v766
        %v768 = vpack.c.bf16 %v767, %v767
        %770 = vrot.lane.b32.xlu0 %v598, 120
        %v771 = vpop.permute.xlu0 %770
        %v773 = vsel %vm599, %v768, 0
        %v776 = vsel %vm661, %v771, 0
        %778 = vmatprep.subr.bf16.mxu0 0
        %779 = vmatpush1.bf16.msra.mxu0 0
        %780 = vmatprep.subr.bf16.mxu0 0
        %781 = vmatpush1.bf16.msra.mxu0 0
        %782 = vmatprep.subr.bf16.mxu0 0
        %783 = vmatpush1.bf16.msra.mxu0 0
        %784 = vmatprep.subr.bf16.mxu0 0
        %785 = vmatpush1.bf16.msra.mxu0 0
        %786 = vmatprep.subr.bf16.mxu0 0
        %787 = vmatpush1.bf16.msra.mxu0 0
        %788 = vmatprep.subr.bf16.mxu0 0
        %789 = vmatpush1.bf16.msra.mxu0 0
        %790 = vmatprep.subr.bf16.mxu0 0
        %791 = vmatpush1.bf16.msra.mxu0 0
        %792 = vmatprep.subr.bf16.mxu0 0
        %793 = vmatpush1.bf16.msra.mxu0 %v776
        %794 = vmatprep.subr.bf16.mxu0 0
        %795 = vmatpush2.bf16.msra.mxu0 0
        %796 = vmatprep.subr.bf16.mxu0 0
        %797 = vmatpush2.bf16.msra.mxu0 0
        %798 = vmatprep.subr.bf16.mxu0 0
        %799 = vmatpush2.bf16.msra.mxu0 0
        %800 = vmatprep.subr.bf16.mxu0 0
        %801 = vmatpush2.bf16.msra.mxu0 0
        %802 = vmatprep.subr.bf16.mxu0 0
        %803 = vmatpush2.bf16.msra.mxu0 0
        %804 = vmatprep.subr.bf16.mxu0 0
        %805 = vmatpush2.bf16.msra.mxu0 0
        %806 = vmatprep.subr.bf16.mxu0 0
        %807 = vmatpush2.bf16.msra.mxu0 0
        %808 = vmatprep.subr.bf16.mxu0 0
        %809 = vmatpush2.bf16.msra.mxu0 0
        %810 = vmatprep.mubr.bf16.mxu0 0
        %811 = vmatmul.mubr.bf16.gmra.mxu0 %v773
        %v812 = vpop.f32.mrf.mxu0
        %v813 = vadd.f32 0.0, %v812
        %v814 = vpop.f32.mrf.mxu0
        %v815 = vpop.f32.mrf.mxu0
        %v816 = vpop.f32.mrf.mxu0
        %817 = vdwg.mxu0
        %818 = vrot.lane.b32.xlu0 %v596, 112
        %v819 = vpop.permute.xlu0 %818
        %820 = vrot.lane.b32.xlu0 %v597, 112
        %v821 = vpop.permute.xlu0 %820
        %v823 = vsel %vm599, %v819, 0
        %v826 = vsel %vm599, %v821, 0
        %828 = vmatprep.subr.bf16.mxu0 0
        %829 = vmatpush1.bf16.xpose.msra.mxu0 0
        %830 = vmatprep.subr.bf16.mxu0 0
        %831 = vmatpush1.bf16.xpose.msra.mxu0 0
        %832 = vmatprep.subr.bf16.mxu0 0
        %833 = vmatpush1.bf16.xpose.msra.mxu0 0
        %834 = vmatprep.subr.bf16.mxu0 0
        %835 = vmatpush1.bf16.xpose.msra.mxu0 0
        %836 = vmatprep.subr.bf16.mxu0 0
        %837 = vmatpush1.bf16.xpose.msra.mxu0 0
        %838 = vmatprep.subr.bf16.mxu0 0
        %839 = vmatpush1.bf16.xpose.msra.mxu0 0
        %840 = vmatprep.subr.bf16.mxu0 0
        %841 = vmatpush1.bf16.xpose.msra.mxu0 0
        %842 = vmatprep.subr.bf16.mxu0 0
        %843 = vmatpush1.bf16.xpose.msra.mxu0 %v826
        %844 = vmatprep.subr.bf16.mxu0 0
        %845 = vmatpush2.bf16.xpose.msra.mxu0 0
        %846 = vmatprep.subr.bf16.mxu0 0
        %847 = vmatpush2.bf16.xpose.msra.mxu0 0
        %848 = vmatprep.subr.bf16.mxu0 0
        %849 = vmatpush2.bf16.xpose.msra.mxu0 0
        %850 = vmatprep.subr.bf16.mxu0 0
        %851 = vmatpush2.bf16.xpose.msra.mxu0 0
        %852 = vmatprep.subr.bf16.mxu0 0
        %853 = vmatpush2.bf16.xpose.msra.mxu0 0
        %854 = vmatprep.subr.bf16.mxu0 0
        %855 = vmatpush2.bf16.xpose.msra.mxu0 0
        %856 = vmatprep.subr.bf16.mxu0 0
        %857 = vmatpush2.bf16.xpose.msra.mxu0 0
        %858 = vmatprep.subr.bf16.mxu0 0
        %859 = vmatpush2.bf16.xpose.msra.mxu0 0
        %860 = vmatprep.mubr.bf16.mxu0 0
        %861 = vmatmul.mubr.bf16.gmra.mxu0 %v823
        %v862 = vpop.f32.mrf.mxu0
        %v863 = vadd.f32 0.0, %v862
        %v864 = vpop.f32.mrf.mxu0
        %v865 = vpop.f32.mrf.mxu0
        %v866 = vpop.f32.mrf.mxu0
        %867 = vdwg.mxu0
        %v868 = vsel %vm599, %v863, -inf
        %869 = vmax.xlane.f32.xlu0 %v868
        %v870 = vpop.xlane.xlu0 %869
        %v871 = vsub.f32 %v863, %v870
        %v872 = vmul.f32 %v871, 1.442695
        %v873 = vpow.pop %v872
        %v874 = vsel %vm599, %v873, 0.0
        %875 = vadd.xlane.f32.xlu0 %v874
        %v876 = vpop.xlane.xlu0 %875
        %v877 = vrcp.pop %v876
        %v878 = vmul.f32 %v873, %v877
        %v879 = vpack.c.bf16 %v878, %v878
        %880 = vrot.lane.b32.xlu0 %v598, 112
        %v881 = vpop.permute.xlu0 %880
        %v883 = vsel %vm599, %v879, 0
        %v886 = vsel %vm661, %v881, 0
        %888 = vmatprep.subr.bf16.mxu0 0
        %889 = vmatpush1.bf16.msra.mxu0 0
        %890 = vmatprep.subr.bf16.mxu0 0
        %891 = vmatpush1.bf16.msra.mxu0 0
        %892 = vmatprep.subr.bf16.mxu0 0
        %893 = vmatpush1.bf16.msra.mxu0 0
        %894 = vmatprep.subr.bf16.mxu0 0
        %895 = vmatpush1.bf16.msra.mxu0 0
        %896 = vmatprep.subr.bf16.mxu0 0
        %897 = vmatpush1.bf16.msra.mxu0 0
        %898 = vmatprep.subr.bf16.mxu0 0
        %899 = vmatpush1.bf16.msra.mxu0 0
        %900 = vmatprep.subr.bf16.mxu0 0
        %901 = vmatpush1.bf16.msra.mxu0 0
        %902 = vmatprep.subr.bf16.mxu0 0
        %903 = vmatpush1.bf16.msra.mxu0 %v886
        %904 = vmatprep.subr.bf16.mxu0 0
        %905 = vmatpush2.bf16.msra.mxu0 0
        %906 = vmatprep.subr.bf16.mxu0 0
        %907 = vmatpush2.bf16.msra.mxu0 0
        %908 = vmatprep.subr.bf16.mxu0 0
        %909 = vmatpush2.bf16.msra.mxu0 0
        %910 = vmatprep.subr.bf16.mxu0 0
        %911 = vmatpush2.bf16.msra.mxu0 0
        %912 = vmatprep.subr.bf16.mxu0 0
        %913 = vmatpush2.bf16.msra.mxu0 0
        %914 = vmatprep.subr.bf16.mxu0 0
        %915 = vmatpush2.bf16.msra.mxu0 0
        %916 = vmatprep.subr.bf16.mxu0 0
        %917 = vmatpush2.bf16.msra.mxu0 0
        %918 = vmatprep.subr.bf16.mxu0 0
        %919 = vmatpush2.bf16.msra.mxu0 0
        %920 = vmatprep.mubr.bf16.mxu0 0
        %921 = vmatmul.mubr.bf16.gmra.mxu0 %v883
        %v922 = vpop.f32.mrf.mxu0
        %v923 = vadd.f32 0.0, %v922
        %v924 = vpop.f32.mrf.mxu0
        %v925 = vpop.f32.mrf.mxu0
        %v926 = vpop.f32.mrf.mxu0
        %927 = vdwg.mxu0
        %928 = vrot.lane.b32.xlu0 %v596, 104
        %v929 = vpop.permute.xlu0 %928
        %930 = vrot.lane.b32.xlu0 %v597, 104
        %v931 = vpop.permute.xlu0 %930
        %v933 = vsel %vm599, %v929, 0
        %v936 = vsel %vm599, %v931, 0
        %938 = vmatprep.subr.bf16.mxu0 0
        %939 = vmatpush1.bf16.xpose.msra.mxu0 0
        %940 = vmatprep.subr.bf16.mxu0 0
        %941 = vmatpush1.bf16.xpose.msra.mxu0 0
        %942 = vmatprep.subr.bf16.mxu0 0
        %943 = vmatpush1.bf16.xpose.msra.mxu0 0
        %944 = vmatprep.subr.bf16.mxu0 0
        %945 = vmatpush1.bf16.xpose.msra.mxu0 0
        %946 = vmatprep.subr.bf16.mxu0 0
        %947 = vmatpush1.bf16.xpose.msra.mxu0 0
        %948 = vmatprep.subr.bf16.mxu0 0
        %949 = vmatpush1.bf16.xpose.msra.mxu0 0
        %950 = vmatprep.subr.bf16.mxu0 0
        %951 = vmatpush1.bf16.xpose.msra.mxu0 0
        %952 = vmatprep.subr.bf16.mxu0 0
        %953 = vmatpush1.bf16.xpose.msra.mxu0 %v936
        %954 = vmatprep.subr.bf16.mxu0 0
        %955 = vmatpush2.bf16.xpose.msra.mxu0 0
        %956 = vmatprep.subr.bf16.mxu0 0
        %957 = vmatpush2.bf16.xpose.msra.mxu0 0
        %958 = vmatprep.subr.bf16.mxu0 0
        %959 = vmatpush2.bf16.xpose.msra.mxu0 0
        %960 = vmatprep.subr.bf16.mxu0 0
        %961 = vmatpush2.bf16.xpose.msra.mxu0 0
        %962 = vmatprep.subr.bf16.mxu0 0
        %963 = vmatpush2.bf16.xpose.msra.mxu0 0
        %964 = vmatprep.subr.bf16.mxu0 0
        %965 = vmatpush2.bf16.xpose.msra.mxu0 0
        %966 = vmatprep.subr.bf16.mxu0 0
        %967 = vmatpush2.bf16.xpose.msra.mxu0 0
        %968 = vmatprep.subr.bf16.mxu0 0
        %969 = vmatpush2.bf16.xpose.msra.mxu0 0
        %970 = vmatprep.mubr.bf16.mxu0 0
        %971 = vmatmul.mubr.bf16.gmra.mxu0 %v933
        %v972 = vpop.f32.mrf.mxu0
        %v973 = vadd.f32 0.0, %v972
        %v974 = vpop.f32.mrf.mxu0
        %v975 = vpop.f32.mrf.mxu0
        %v976 = vpop.f32.mrf.mxu0
        %977 = vdwg.mxu0
        %v978 = vsel %vm599, %v973, -inf
        %979 = vmax.xlane.f32.xlu0 %v978
        %v980 = vpop.xlane.xlu0 %979
        %v981 = vsub.f32 %v973, %v980
        %v982 = vmul.f32 %v981, 1.442695
        %v983 = vpow.pop %v982
        %v984 = vsel %vm599, %v983, 0.0
        %985 = vadd.xlane.f32.xlu0 %v984
        %v986 = vpop.xlane.xlu0 %985
        %v987 = vrcp.pop %v986
        %v988 = vmul.f32 %v983, %v987
        %v989 = vpack.c.bf16 %v988, %v988
        %990 = vrot.lane.b32.xlu0 %v598, 104
        %v991 = vpop.permute.xlu0 %990
        %v993 = vsel %vm599, %v989, 0
        %v996 = vsel %vm661, %v991, 0
        %998 = vmatprep.subr.bf16.mxu0 0
        %999 = vmatpush1.bf16.msra.mxu0 0
        %1000 = vmatprep.subr.bf16.mxu0 0
        %1001 = vmatpush1.bf16.msra.mxu0 0
        %1002 = vmatprep.subr.bf16.mxu0 0
        %1003 = vmatpush1.bf16.msra.mxu0 0
        %1004 = vmatprep.subr.bf16.mxu0 0
        %1005 = vmatpush1.bf16.msra.mxu0 0
        %1006 = vmatprep.subr.bf16.mxu0 0
        %1007 = vmatpush1.bf16.msra.mxu0 0
        %1008 = vmatprep.subr.bf16.mxu0 0
        %1009 = vmatpush1.bf16.msra.mxu0 0
        %1010 = vmatprep.subr.bf16.mxu0 0
        %1011 = vmatpush1.bf16.msra.mxu0 0
        %1012 = vmatprep.subr.bf16.mxu0 0
        %1013 = vmatpush1.bf16.msra.mxu0 %v996
        %1014 = vmatprep.subr.bf16.mxu0 0
        %1015 = vmatpush2.bf16.msra.mxu0 0
        %1016 = vmatprep.subr.bf16.mxu0 0
        %1017 = vmatpush2.bf16.msra.mxu0 0
        %1018 = vmatprep.subr.bf16.mxu0 0
        %1019 = vmatpush2.bf16.msra.mxu0 0
        %1020 = vmatprep.subr.bf16.mxu0 0
        %1021 = vmatpush2.bf16.msra.mxu0 0
        %1022 = vmatprep.subr.bf16.mxu0 0
        %1023 = vmatpush2.bf16.msra.mxu0 0
        %1024 = vmatprep.subr.bf16.mxu0 0
        %1025 = vmatpush2.bf16.msra.mxu0 0
        %1026 = vmatprep.subr.bf16.mxu0 0
        %1027 = vmatpush2.bf16.msra.mxu0 0
        %1028 = vmatprep.subr.bf16.mxu0 0
        %1029 = vmatpush2.bf16.msra.mxu0 0
        %1030 = vmatprep.mubr.bf16.mxu0 0
        %1031 = vmatmul.mubr.bf16.gmra.mxu0 %v993
        %v1032 = vpop.f32.mrf.mxu0
        %v1033 = vadd.f32 0.0, %v1032
        %v1034 = vpop.f32.mrf.mxu0
        %v1035 = vpop.f32.mrf.mxu0
        %v1036 = vpop.f32.mrf.mxu0
        %1037 = vdwg.mxu0
        %1039 = vrot.lane.b32.xlu0 %v813, 8
        %v1040 = vpop.permute.xlu0 %1039
        %1043 = vrot.lane.b32.xlu0 %v923, 16
        %v1044 = vpop.permute.xlu0 %1043
        %1047 = vrot.lane.b32.xlu0 %v1033, 24
        %v1048 = vpop.permute.xlu0 %1047
        %v1050 = vsel %vm599, %v700, %v1040
        %vm1051 = vcmask 130048
        %v1052 = vsel %vm1051, %v1050, %v1044
        %vm1053 = vcmask 195584
        %v1054 = vsel %vm1053, %v1052, %v1048
        %v1055 = vpack.c.bf16 %v1054, %v1054
        %v1056 = vld [vmem:[#allocation10] sm:$0xf]
        %v1057 = vld [vmem:[#allocation10 + $0x4] sm:$0xf]
        %v1058 = vld [vmem:[#allocation10 + $0x8] sm:$0xf]
        %v1059 = vld [vmem:[#allocation10 + $0xc] sm:$0xf]
        %v1060 = vld [vmem:[%s6] sm:$0x1]
        %v1062 = vlaneseq
        %v1063 = vshrl.u32 %v1062, 7
        %v1064 = vsub.s32 0, %v1063
        %v1065 = vrot.slane %v1060, %v1064
        %v1071 = vunpack.c.l.b16 %v1056
        %v1072 = vunpack.c.l.b16 %v1057
        %v1073 = vunpack.c.l.b16 %v1058
        %v1074 = vunpack.c.l.b16 %v1059
        %v1075 = vpack.c.b16 %v1072, %v1071
        %v1076 = vpack.c.b16 %v1074, %v1073
        %v1080 = vsel %vm418, %v1055, 0
        %1082 = vmatprep.subr.bf16.mxu0 0
        %1083 = vmatpush1.bf16.msra.mxu0 0
        %1084 = vmatprep.subr.bf16.mxu0 0
        %1085 = vmatpush1.bf16.msra.mxu0 0
        %1086 = vmatprep.subr.bf16.mxu0 0
        %1087 = vmatpush1.bf16.msra.mxu0 0
        %1088 = vmatprep.subr.bf16.mxu0 0
        %1089 = vmatpush1.bf16.msra.mxu0 0
        %1090 = vmatprep.subr.bf16.mxu0 0
        %1091 = vmatpush1.bf16.msra.mxu0 0
        %1092 = vmatprep.subr.bf16.mxu0 0
        %1093 = vmatpush1.bf16.msra.mxu0 0
        %1094 = vmatprep.subr.bf16.mxu0 0
        %1095 = vmatpush1.bf16.msra.mxu0 %v1076
        %1096 = vmatprep.subr.bf16.mxu0 0
        %1097 = vmatpush1.bf16.msra.mxu0 %v1075
        %1098 = vmatprep.subr.bf16.mxu0 0
        %1099 = vmatpush2.bf16.msra.mxu0 0
        %1100 = vmatprep.subr.bf16.mxu0 0
        %1101 = vmatpush2.bf16.msra.mxu0 0
        %1102 = vmatprep.subr.bf16.mxu0 0
        %1103 = vmatpush2.bf16.msra.mxu0 0
        %1104 = vmatprep.subr.bf16.mxu0 0
        %1105 = vmatpush2.bf16.msra.mxu0 0
        %1106 = vmatprep.subr.bf16.mxu0 0
        %1107 = vmatpush2.bf16.msra.mxu0 0
        %1108 = vmatprep.subr.bf16.mxu0 0
        %1109 = vmatpush2.bf16.msra.mxu0 0
        %1110 = vmatprep.subr.bf16.mxu0 0
        %1111 = vmatpush2.bf16.msra.mxu0 0
        %1112 = vmatprep.subr.bf16.mxu0 0
        %1113 = vmatpush2.bf16.msra.mxu0 0
        %1114 = vmatprep.mubr.bf16.mxu0 0
        %1115 = vmatmul.mubr.bf16.gmra.mxu0 %v1080
        %v1116 = vpop.f32.mrf.mxu0
        %v1117 = vadd.f32 %v1065, %v1116
        %v1118 = vpop.f32.mrf.mxu0
        %v1119 = vpop.f32.mrf.mxu0
        %v1120 = vpop.f32.mrf.mxu0
        %1121 = vdwg.mxu0
        %1122 = vst.msk [vmem:[%s393] sm:$0xff] %vm418, %v1117
        %s1123 = sand.u32 %s198, 1
        %s1124 = scalar_lea.sflag [#allocation4], %s1123
        %s1125 = sand.u32 %s198, 1
        %s1126 = smul.addr %s1125, 8
        %s1127 = scalar_lea.vmem [#allocation11], %s1126
        // Predicated region
        $region69: #{tpu_custom_call.1} parent=47 // pred_check
          %p1128 = pneg %p208
        $region70: #{tpu_custom_call.1} parent=47 // pred_check_branch
          %1130 = sbr.rel (%p1128) target = $region72
        $region71: #{tpu_custom_call.1} parent=47 // pred_region
          %s1132 = ssub.s32 128, 128
          %1133 = vsyncadd %s1124, %s1132
          %s1134 = smul.addr %s28, 128
          %s1135 = scalar_lea.hbm %s7, %s1134
          %s1137 = sshll.u32 %s1127, 4
          %s1138 = int_to_ptr.vmem [resolvable:$true] %s1137
          %1140 = dma.vmem_to_hbm [thread:$0]  %s1138, 128, %s1135, %s1124
        $region72: #{tpu_custom_call.1} parent=47 // pred_fallthru
          _
      $region48: #{tpu_custom_call.1} parent=5 // pred_fallthru
        _
      %p1141 = scmp.le.s32.totalorder 2, %s23
      // Predicated region
      $region73: #{tpu_custom_call.1} parent=5 // pred_check
        %p1142 = pneg %p1141
      $region74: #{tpu_custom_call.1} parent=5 // pred_check_branch
        %1144 = sbr.rel (%p1142) target = $region76
      $region75: #{tpu_custom_call.1} parent=5 // pred_region
        %s1145 = ssub.s32 %s23, 2
        // Predicated region
        $region77: #{tpu_custom_call.1} parent=75 // pred_check
          %p1146 = pneg %p214
        $region78: #{tpu_custom_call.1} parent=75 // pred_check_branch
          %1148 = sbr.rel (%p1146) target = $region80
        $region79: #{tpu_custom_call.1} parent=75 // pred_region
          %s1149 = sand.u32 %s199, 1
          %s1150 = scalar_lea.sflag [#allocation4], %s1149
          %s1151 = sand.u32 %s199, 1
          %s1152 = smul.addr %s1151, 8
          %s1153 = scalar_lea.vmem [#allocation11], %s1152
          %1154 = dma.done %s1150, 128
        $region80: #{tpu_custom_call.1} parent=75 // pred_fallthru
          _
      $region76: #{tpu_custom_call.1} parent=5 // pred_fallthru
        _
    $region6: #{tpu_custom_call.1} parent=1 // loop_footer
      %s27 = sadd.s32 1, %s23
    $region7: #{tpu_custom_call.1} parent=1 // loop_footer_branch
      %22 = sbr.rel target = $region3
    $region8: #{tpu_custom_call.1} parent=1 // loop_exit
      _
    %1155 = vsyncpa [#allocation3], 1
    %s1156 = scalar_lea.sflag [#allocation3], 1
    %1157 = vsyncpa %s1156, 1
    %1158 = vsyncpa [#allocation6], 1
    %s1159 = scalar_lea.sflag [#allocation6], 1
    %1160 = vsyncpa %s1159, 1
    %1161 = vsyncpa [#allocation9], 1
    %1162 = vsyncpa [#allocation4], 1
    %s1163 = scalar_lea.sflag [#allocation4], 1
    %1164 = vsyncpa %s1163, 1

</llo_original>
